<compile_context>
chip_gen: v5e
topology: v5e:2x2
jax: 0.10.0
libtpu: 0.0.40
codegen_flags: <defaults>
</compile_context>

<pallas_src>
import numpy as np
import jax
import jax.numpy as jnp
from jax.experimental import pallas as pl
from jax.experimental.pallas import tpu as pltpu

# ---------------- problem sizes (module defaults, small test graph) ----------------
N_NODES = 16          # 2 ring graphs x 8 nodes
N_FEAT = 8            # num_node_features
HIDDEN = 128          # hidden_size (GATNetwork default)
N_ACTIONS = 8
N_GRAPHS = 2
N_LAYERS = 3          # n_layers (GATNetwork default)
G_PAD = 8             # pooled rows padded to a full sublane tile
A_PAD = 128           # action logits padded to a full 128-lane tile (lane-dense store)
EDGE_DIM = 2          # use_edge_attr=True -> edge_dim=2
S_COLS = 40           # 16 (lsel) + 16 (rsel) + 2 (e2d) + 6 zero pad  (multiple of 8)

ATT_SLOPE = 0.2       # GATv2Conv negative_slope
ACT_SLOPE = 0.01      # LeakyReLU (between layers and in the head)
NORM_EPS = 1e-5       # GraphNorm eps

BF16 = jnp.bfloat16
F32 = jnp.float32

# ---- packed f32 "row slab" layout (width = HIDDEN = 128, every offset 8-aligned) ----
ROWS_PER_LAYER = 16   # per layer: [0]=bl [1]=br [2]=bconv [3]=att [8:10]=lin_edge W
NORM_BASE = N_LAYERS * ROWS_PER_LAYER               # 48
ROWS_PER_NORM = 8                                   # [0]=gamma [1]=beta [2]=mean_scale
HEAD_BASE = NORM_BASE + (N_LAYERS - 1) * ROWS_PER_NORM   # 64: [64]=bh1 [65]=bh2(padded)
MASK_BASE = HEAD_BASE + 8                           # 72: adjacency mask (cols 0:16)
POOL_BASE = MASK_BASE + N_NODES                     # 88: global_add_pool one-hot
P_BASE = POOL_BASE + G_PAD                          # 96: GraphNorm scatter matrix P
RSLAB_ROWS = P_BASE + N_NODES                       # 112

# ---- packed bf16 weight slab layout (width = 2*HIDDEN = 256) ----
# rows [128*l : 128*(l+1)] = [Wl_l | Wr_l] (layer 0 zero-padded from fan_in=8 to 128)
# rows [384 : 512]         = [Wh1 | Wh2_pad]  (head Linear weights)
WSLAB_ROWS = (N_LAYERS + 1) * HIDDEN                # 512


def _mxu_dot(a, b):
    """bf16 x bf16 -> f32 matmul (MXU-native; identical in kernel and reference)."""
    return jnp.dot(a.astype(BF16), b.astype(BF16), preferred_element_type=F32)


def _leaky_relu(x, slope):
    return jnp.where(x > 0, x, slope * x)


def _recip(x, approx):
    """EUP approx reciprocal inside the kernel; exact divide in the JAX reference."""
    if approx:
        return pl.reciprocal(x, approx=True)
    return 1.0 / x


def _gatv2_layer(h, s_mat, mask, w_lr, vec_block, approx):
    """Dense single-head GATv2Conv (add_self_loops=False, edge_dim=2).

    w_lr      : (fan_in_pad, 2H)  fused [lin_l | lin_r] weight
    vec_block : (16, H) rows: [0]=bl [1]=br [2]=bconv [3]=att, [8:16]=lin_edge W (padded)
    s_mat     : (N*N, 40) = [lsel | rsel | e2d | 0]  constant pair selector
    out_i = sum_j softmax_j( a . lrelu(Wl h_j + Wr h_i + We e_ij) ) * (Wl h_j) + b
    """
    n = N_NODES
    hdim = HIDDEN
    bl = vec_block[0:1, :]
    br = vec_block[1:2, :]
    bconv = vec_block[2:3, :]
    att = vec_block[3:4, :]
    we_block = vec_block[8:16, :]                      # (8, H), rows 2..7 are zero

    xlr = _mxu_dot(h, w_lr)                            # (N, 2H) fused lin_l / lin_r
    xl = xlr[:, 0:hdim] + bl                           # source messages
    xr = xlr[:, hdim:2 * hdim] + br                    # target term

    # one fused matmul broadcasting (Wl h_j + Wr h_i + We e_ij) to every (i, j) pair
    rhs = jnp.concatenate([xl, xr, we_block], axis=0)  # (2N + 8, H) = (40, H)
    pre = _mxu_dot(s_mat, rhs)                         # (N*N, H)
    pre = _leaky_relu(pre, ATT_SLOPE)
    scores = jnp.sum((pre * att).reshape(n, n, hdim), axis=-1)   # (N, N)

    # masked softmax over source nodes j (targets with no in-edges -> all-zero row)
    s = jnp.where(mask > 0, scores, jnp.float32(-1e30))
    m = jnp.max(s, axis=-1, keepdims=True)
    p = jnp.exp(s - m) * mask
    d = jnp.sum(p, axis=-1, keepdims=True)
    alpha = p * _recip(jnp.maximum(d, jnp.float32(1e-30)), approx)

    return _mxu_dot(alpha, xl) + bconv                 # (N, H)


def _graph_norm(h, p_scatter, norm_block):
    """pyg.nn.GraphNorm with a precomputed per-graph mean scatter matrix P (N, N)."""
    gamma = norm_block[0:1, :]
    beta = norm_block[1:2, :]
    mscale = norm_block[2:3, :]
    mean = _mxu_dot(p_scatter, h)                      # (N, H) per-graph mean scatter
    centered = h - mean * mscale
    var = _mxu_dot(p_scatter, centered * centered)
    return gamma * centered * jax.lax.rsqrt(var + NORM_EPS) + beta


def _gather_params(wslab, rslab, sslab):
    """Slice the packed slabs into logical pieces.

    Works identically on kernel Refs (static-slice loads) and on plain jnp arrays,
    so the Pallas kernel and the pure-JAX reference share the exact same math.
    """
    npairs = N_NODES * N_NODES
    s_mat = sslab[0:npairs, :]                                        # (256, 40) bf16
    mask = rslab[MASK_BASE:MASK_BASE + N_NODES, :][:, 0:N_NODES]      # (16, 16) f32
    pool = rslab[POOL_BASE:POOL_BASE + G_PAD, :][:, 0:N_NODES]        # (8, 16)
    p_scatter = rslab[P_BASE:P_BASE + N_NODES, :][:, 0:N_NODES]       # (16, 16)

    layer_params = []
    for l in range(N_LAYERS):
        w_lr = wslab[l * HIDDEN:(l + 1) * HIDDEN, :]                  # (128, 256)
        vec_block = rslab[l * ROWS_PER_LAYER:(l + 1) * ROWS_PER_LAYER, :]
        layer_params.append((w_lr, vec_block))

    norm_params = [rslab[NORM_BASE + l * ROWS_PER_NORM:
                         NORM_BASE + (l + 1) * ROWS_PER_NORM, :]
                   for l in range(N_LAYERS - 1)]

    head_w = wslab[N_LAYERS * HIDDEN:(N_LAYERS + 1) * HIDDEN, :]      # (128, 256)
    wh1 = head_w[:, 0:HIDDEN]
    wh2 = head_w[:, HIDDEN:2 * HIDDEN]
    head_b = rslab[HEAD_BASE:HEAD_BASE + 8, :]
    bh1 = head_b[0:1, :]
    bh2 = head_b[1:2, :]
    return s_mat, mask, pool, p_scatter, layer_params, norm_params, wh1, wh2, bh1, bh2


def _forward_math(x, s_mat, mask, pool, p_scatter, layer_params, norm_params,
                  wh1, wh2, bh1, bh2, approx):
    """Shared math: traced unchanged inside the Pallas kernel and as the JAX reference."""
    h = x.astype(F32)
    for l in range(N_LAYERS):
        w_lr, vec_block = layer_params[l]
        h = _gatv2_layer(h, s_mat, mask, w_lr, vec_block, approx)
        if l < N_LAYERS - 1:                 # GraphNorm + act on all but the last conv
            h = _graph_norm(h, p_scatter, norm_params[l])
            h = _leaky_relu(h, ACT_SLOPE)
    pooled = _mxu_dot(pool, h)               # global_add_pool          (G_PAD, H)
    z = _leaky_relu(_mxu_dot(pooled, wh1) + bh1, ACT_SLOPE)
    return _mxu_dot(z, wh2) + bh2            # lane-dense padded head   (G_PAD, A_PAD)


def gat_kernel(x_ref, wslab_ref, rslab_ref, sslab_ref, o_ref):
    params = _gather_params(wslab_ref, rslab_ref, sslab_ref)
    o_ref[...] = _forward_math(x_ref[...], *params, approx=True)


def gat_forward_pallas(x_pad, wslab, rslab, sslab):
    vmem = pl.BlockSpec(memory_space=pltpu.MemorySpace.VMEM)
    out = pl.pallas_call(
        gat_kernel,
        out_shape=jax.ShapeDtypeStruct((G_PAD, A_PAD), F32),   # lane-dense output tile
        in_specs=[vmem, vmem, vmem, vmem],
        out_specs=vmem,
    )(x_pad, wslab, rslab, sslab)
    return out[:N_GRAPHS, :N_ACTIONS]        # strip sublane / lane padding


if __name__ == "__main__":
    key = jax.random.PRNGKey(0)
    keys = jax.random.split(key, 32)

    N, F_IN, H, A = N_NODES, N_FEAT, HIDDEN, N_ACTIONS

    # ---- synthetic batched graph: 2 undirected ring graphs of 8 nodes each ----
    edges = []
    for g in range(N_GRAPHS):
        base = g * 8
        for i in range(8):
            a, b = base + i, base + (i + 1) % 8
            edges.append((a, b))
            edges.append((b, a))
    edge_index = np.array(edges, dtype=np.int32).T                 # (2, E)
    E = edge_index.shape[1]
    batch = np.repeat(np.arange(N_GRAPHS), 8)                      # node -> graph id

    x = np.asarray(jax.random.normal(keys[0], (N, F_IN), F32))
    edge_attr = np.asarray(jax.random.normal(keys[1], (E, EDGE_DIM), F32))

    # ---- dense glue: mask, fused pair selector S, pooling / GraphNorm matrices ----
    src, dst = edge_index[0], edge_index[1]                        # message src -> dst
    mask_np = np.zeros((N, N), np.float32)
    mask_np[dst, src] = 1.0                                        # mask[i, j]: edge j -> i
    # TODO(synk): duplicate parallel edges collapse to one entry in this dense layout.
    e2d_np = np.zeros((N * N, EDGE_DIM), np.float32)
    e2d_np[dst * N + src, :] = edge_attr

    rows = np.arange(N * N)
    S_np = np.zeros((N * N, S_COLS), np.float32)
    S_np[rows, rows % N] = 1.0                       # lsel: selects source node j
    S_np[rows, N + rows // N] = 1.0                  # rsel: selects target node i
    S_np[:, 2 * N:2 * N + EDGE_DIM] = e2d_np         # dense edge attributes

    pool_np = np.zeros((G_PAD, N), np.float32)
    pool_np[batch, np.arange(N)] = 1.0
    counts = pool_np.sum(axis=1)
    inv = np.zeros_like(counts)
    inv[counts > 0] = 1.0 / counts[counts > 0]
    P_np = (pool_np.T * inv) @ pool_np               # (N, N) GraphNorm mean scatter

    # ---- synthetic parameters packed into slabs (shapes match the PyTorch module) ----
    # TODO(synk): glorot / orthogonal init values not reproduced; synthetic gaussians.
    def rnd(k, shape, scale):
        return np.asarray(jax.random.normal(k, shape, F32)) * scale

    wslab_np = np.zeros((WSLAB_ROWS, 2 * H), np.float32)
    rslab_np = np.zeros((RSLAB_ROWS, H), np.float32)

    kidx = 2
    fan_in = F_IN
    for l in range(N_LAYERS):
        wl = rnd(keys[kidx], (fan_in, H), 0.1); kidx += 1
        wr = rnd(keys[kidx], (fan_in, H), 0.1); kidx += 1
        we = rnd(keys[kidx], (EDGE_DIM, H), 0.1); kidx += 1
        att = rnd(keys[kidx], (1, H), 0.1); kidx += 1
        bl = rnd(keys[kidx], (1, H), 0.01); kidx += 1
        br = rnd(keys[kidx], (1, H), 0.01); kidx += 1
        bconv = rnd(keys[kidx], (1, H), 0.01); kidx += 1

        wslab_np[l * H:l * H + fan_in, 0:H] = wl          # fused [Wl | Wr]
        wslab_np[l * H:l * H + fan_in, H:2 * H] = wr
        base = l * ROWS_PER_LAYER
        rslab_np[base + 0] = bl
        rslab_np[base + 1] = br
        rslab_np[base + 2] = bconv
        rslab_np[base + 3] = att
        rslab_np[base + 8:base + 8 + EDGE_DIM] = we       # lin_edge weight (bias-free)
        fan_in = H

    for l in range(N_LAYERS - 1):                         # GraphNorm default init
        base = NORM_BASE + l * ROWS_PER_NORM
        rslab_np[base + 0] = 1.0                          # weight (gamma)
        rslab_np[base + 1] = 0.0                          # bias (beta)
        rslab_np[base + 2] = 1.0                          # mean_scale

    wh1 = rnd(keys[kidx], (H, H), 0.1); kidx += 1
    bh1 = rnd(keys[kidx], (1, H), 0.01); kidx += 1
    wh2 = rnd(keys[kidx], (H, A), float(np.sqrt(2.0 / H))); kidx += 1
    bh2 = rnd(keys[kidx], (1, A), 0.01); kidx += 1
    wslab_np[3 * H:4 * H, 0:H] = wh1                      # head [Wh1 | Wh2_pad]
    wslab_np[3 * H:4 * H, H:H + A] = wh2
    rslab_np[HEAD_BASE] = bh1
    rslab_np[HEAD_BASE + 1, 0:A] = bh2

    rslab_np[MASK_BASE:MASK_BASE + N, 0:N] = mask_np      # adjacency mask (f32)
    rslab_np[POOL_BASE:POOL_BASE + G_PAD, 0:N] = pool_np  # global_add_pool one-hot
    rslab_np[P_BASE:P_BASE + N, 0:N] = P_np               # GraphNorm scatter

    x_pad_np = np.zeros((N, H), np.float32)               # node features, lane-padded
    x_pad_np[:, 0:F_IN] = x

    x_pad = jnp.asarray(x_pad_np, BF16)
    wslab = jnp.asarray(wslab_np, BF16)                   # MXU weight slab
    rslab = jnp.asarray(rslab_np, F32)                    # biases / att / norm / mask / pool
    sslab = jnp.asarray(S_np, BF16)                       # fused pair selector (0/1 exact)

    # ---- run the Pallas kernel ----
    out = gat_forward_pallas(x_pad, wslab, rslab, sslab)
    out = jax.block_until_ready(out)

    # ---- pure-JAX reference: identical math & dtypes (exact reciprocal) ----
    ref_full = _forward_math(x_pad, *_gather_params(wslab, rslab, sslab), approx=False)
    ref = jax.block_until_ready(ref_full)[:N_GRAPHS, :N_ACTIONS]

    assert out.shape == (N_GRAPHS, N_ACTIONS)
    assert jnp.allclose(out, ref, atol=2e-2, rtol=2e-2), "mismatch vs JAX reference"
    print("KERNEL_OK")
</pallas_src>

<mosaic_0001>
module attributes {stable_mosaic.version = 11 : i64} {
  func.func @gat_kernel(%arg0: memref<16x128xbf16, #tpu.memory_space<vmem>>, %arg1: memref<512x256xbf16, #tpu.memory_space<vmem>>, %arg2: memref<112x128xf32, #tpu.memory_space<vmem>>, %arg3: memref<256x40xbf16, #tpu.memory_space<vmem>>, %arg4: memref<8x128xf32, #tpu.memory_space<vmem>>) attributes {dimension_semantics = [], scalar_prefetch = 0 : i64, scratch_operands = 0 : i64, tpu.core_type = #tpu.core_type<tc>} {
    %c0 = arith.constant 0 : index
    %c0_0 = arith.constant 0 : index
    %0 = vector.load %arg3[%c0, %c0_0] : memref<256x40xbf16, #tpu.memory_space<vmem>>, vector<256x40xbf16>
    %c72 = arith.constant 72 : index
    %c0_1 = arith.constant 0 : index
    %1 = vector.load %arg2[%c72, %c0_1] : memref<112x128xf32, #tpu.memory_space<vmem>>, vector<16x128xf32>
    %2 = vector.extract_strided_slice %1 {offsets = [0, 0], sizes = [16, 16], strides = [1, 1]} : vector<16x128xf32> to vector<16x16xf32>
    %c88 = arith.constant 88 : index
    %c0_2 = arith.constant 0 : index
    %3 = vector.load %arg2[%c88, %c0_2] : memref<112x128xf32, #tpu.memory_space<vmem>>, vector<8x128xf32>
    %4 = vector.extract_strided_slice %3 {offsets = [0, 0], sizes = [8, 16], strides = [1, 1]} : vector<8x128xf32> to vector<8x16xf32>
    %c96 = arith.constant 96 : index
    %c0_3 = arith.constant 0 : index
    %5 = vector.load %arg2[%c96, %c0_3] : memref<112x128xf32, #tpu.memory_space<vmem>>, vector<16x128xf32>
    %6 = vector.extract_strided_slice %5 {offsets = [0, 0], sizes = [16, 16], strides = [1, 1]} : vector<16x128xf32> to vector<16x16xf32>
    %c0_4 = arith.constant 0 : index
    %c0_5 = arith.constant 0 : index
    %7 = vector.load %arg1[%c0_4, %c0_5] : memref<512x256xbf16, #tpu.memory_space<vmem>>, vector<128x256xbf16>
    %c0_6 = arith.constant 0 : index
    %c0_7 = arith.constant 0 : index
    %8 = vector.load %arg2[%c0_6, %c0_7] : memref<112x128xf32, #tpu.memory_space<vmem>>, vector<16x128xf32>
    %c128 = arith.constant 128 : index
    %c0_8 = arith.constant 0 : index
    %9 = vector.load %arg1[%c128, %c0_8] : memref<512x256xbf16, #tpu.memory_space<vmem>>, vector<128x256xbf16>
    %c16 = arith.constant 16 : index
    %c0_9 = arith.constant 0 : index
    %10 = vector.load %arg2[%c16, %c0_9] : memref<112x128xf32, #tpu.memory_space<vmem>>, vector<16x128xf32>
    %c256 = arith.constant 256 : index
    %c0_10 = arith.constant 0 : index
    %11 = vector.load %arg1[%c256, %c0_10] : memref<512x256xbf16, #tpu.memory_space<vmem>>, vector<128x256xbf16>
    %c32 = arith.constant 32 : index
    %c0_11 = arith.constant 0 : index
    %12 = vector.load %arg2[%c32, %c0_11] : memref<112x128xf32, #tpu.memory_space<vmem>>, vector<16x128xf32>
    %c48 = arith.constant 48 : index
    %c0_12 = arith.constant 0 : index
    %13 = vector.load %arg2[%c48, %c0_12] : memref<112x128xf32, #tpu.memory_space<vmem>>, vector<8x128xf32>
    %c56 = arith.constant 56 : index
    %c0_13 = arith.constant 0 : index
    %14 = vector.load %arg2[%c56, %c0_13] : memref<112x128xf32, #tpu.memory_space<vmem>>, vector<8x128xf32>
    %c384 = arith.constant 384 : index
    %c0_14 = arith.constant 0 : index
    %15 = vector.load %arg1[%c384, %c0_14] : memref<512x256xbf16, #tpu.memory_space<vmem>>, vector<128x256xbf16>
    %16 = vector.extract_strided_slice %15 {offsets = [0, 0], sizes = [128, 128], strides = [1, 1]} : vector<128x256xbf16> to vector<128x128xbf16>
    %17 = vector.extract_strided_slice %15 {offsets = [0, 128], sizes = [128, 128], strides = [1, 1]} : vector<128x256xbf16> to vector<128x128xbf16>
    %c64 = arith.constant 64 : index
    %c0_15 = arith.constant 0 : index
    %18 = vector.load %arg2[%c64, %c0_15] : memref<112x128xf32, #tpu.memory_space<vmem>>, vector<8x128xf32>
    %19 = vector.extract_strided_slice %18 {offsets = [0, 0], sizes = [1, 128], strides = [1, 1]} : vector<8x128xf32> to vector<1x128xf32>
    %20 = vector.extract_strided_slice %18 {offsets = [1, 0], sizes = [1, 128], strides = [1, 1]} : vector<8x128xf32> to vector<1x128xf32>
    %c0_16 = arith.constant 0 : index
    %c0_17 = arith.constant 0 : index
    %21 = vector.load %arg0[%c0_16, %c0_17] : memref<16x128xbf16, #tpu.memory_space<vmem>>, vector<16x128xbf16>
    %22 = arith.extf %21 : vector<16x128xbf16> to vector<16x128xf32>
    %23 = vector.extract_strided_slice %8 {offsets = [0, 0], sizes = [1, 128], strides = [1, 1]} : vector<16x128xf32> to vector<1x128xf32>
    %24 = vector.extract_strided_slice %8 {offsets = [1, 0], sizes = [1, 128], strides = [1, 1]} : vector<16x128xf32> to vector<1x128xf32>
    %25 = vector.extract_strided_slice %8 {offsets = [2, 0], sizes = [1, 128], strides = [1, 1]} : vector<16x128xf32> to vector<1x128xf32>
    %26 = vector.extract_strided_slice %8 {offsets = [3, 0], sizes = [1, 128], strides = [1, 1]} : vector<16x128xf32> to vector<1x128xf32>
    %27 = vector.extract_strided_slice %8 {offsets = [8, 0], sizes = [8, 128], strides = [1, 1]} : vector<16x128xf32> to vector<8x128xf32>
    %28 = arith.truncf %22 : vector<16x128xf32> to vector<16x128xbf16>
    %cst = arith.constant dense<0.000000e+00> : vector<16x256xf32>
    %29 = tpu.matmul %28, %7, %cst {dimension_numbers = #tpu.dot_dimension_numbers<[1], [0], [0], [1], [0, 0, 1, 1], [], []>} : vector<16x128xbf16>, vector<128x256xbf16>, vector<16x256xf32> -> vector<16x256xf32>
    %30 = vector.extract_strided_slice %29 {offsets = [0, 0], sizes = [16, 128], strides = [1, 1]} : vector<16x256xf32> to vector<16x128xf32>
    %31 = vector.broadcast %23 : vector<1x128xf32> to vector<16x128xf32>
    %32 = arith.addf %30, %31 : vector<16x128xf32>
    %33 = vector.extract_strided_slice %29 {offsets = [0, 128], sizes = [16, 128], strides = [1, 1]} : vector<16x256xf32> to vector<16x128xf32>
    %34 = vector.broadcast %24 : vector<1x128xf32> to vector<16x128xf32>
    %35 = arith.addf %33, %34 : vector<16x128xf32>
    %36 = tpu.concatenate %32, %35, %27 in 0 : vector<16x128xf32>, vector<16x128xf32>, vector<8x128xf32> -> vector<40x128xf32>
    %37 = arith.truncf %36 : vector<40x128xf32> to vector<40x128xbf16>
    %cst_18 = arith.constant dense<0.000000e+00> : vector<256x128xf32>
    %38 = tpu.matmul %0, %37, %cst_18 {dimension_numbers = #tpu.dot_dimension_numbers<[1], [0], [0], [1], [0, 0, 1, 1], [], []>} : vector<256x40xbf16>, vector<40x128xbf16>, vector<256x128xf32> -> vector<256x128xf32>
    %cst_19 = arith.constant 0.000000e+00 : f32
    %39 = vector.broadcast %cst_19 : f32 to vector<256x128xf32>
    %40 = arith.cmpf ogt, %38, %39 : vector<256x128xf32>
    %cst_20 = arith.constant 2.000000e-01 : f32
    %41 = vector.broadcast %cst_20 : f32 to vector<256x128xf32>
    %42 = arith.mulf %41, %38 : vector<256x128xf32>
    %43 = arith.select %40, %38, %42 : vector<256x128xi1>, vector<256x128xf32>
    %44 = vector.broadcast %26 : vector<1x128xf32> to vector<256x128xf32>
    %45 = arith.mulf %43, %44 : vector<256x128xf32>
    %46 = vector.shape_cast %45 : vector<256x128xf32> to vector<16x16x128xf32>
    %cst_21 = arith.constant dense<0.000000e+00> : vector<16x16xf32>
    %47 = vector.multi_reduction <add>, %46, %cst_21 [2] : vector<16x16x128xf32> to vector<16x16xf32>
    %cst_22 = arith.constant 0.000000e+00 : f32
    %48 = vector.broadcast %cst_22 : f32 to vector<16x16xf32>
    %49 = arith.cmpf ogt, %2, %48 : vector<16x16xf32>
    %cst_23 = arith.constant -1.000000e+30 : f32
    %50 = vector.broadcast %cst_23 : f32 to vector<16x16xf32>
    %51 = arith.select %49, %47, %50 : vector<16x16xi1>, vector<16x16xf32>
    %cst_24 = arith.constant dense<0xFF800000> : vector<16xf32>
    %52 = vector.multi_reduction <maximumf>, %51, %cst_24 [1] : vector<16x16xf32> to vector<16xf32>
    %53 = vector.shape_cast %52 : vector<16xf32> to vector<16x1xf32>
    %54 = vector.broadcast %53 : vector<16x1xf32> to vector<16x16xf32>
    %55 = arith.subf %51, %54 : vector<16x16xf32>
    %56 = math.exp %55 : vector<16x16xf32>
    %57 = arith.mulf %56, %2 : vector<16x16xf32>
    %cst_25 = arith.constant dense<0.000000e+00> : vector<16xf32>
    %58 = vector.multi_reduction <add>, %57, %cst_25 [1] : vector<16x16xf32> to vector<16xf32>
    %59 = vector.shape_cast %58 : vector<16xf32> to vector<16x1xf32>
    %cst_26 = arith.constant 1.000000e-30 : f32
    %60 = vector.broadcast %cst_26 : f32 to vector<16x1xf32>
    %61 = arith.maximumf %59, %60 : vector<16x1xf32>
    %62 = tpu.reciprocal %61 {approx = true} : vector<16x1xf32> -> vector<16x1xf32>
    %63 = vector.broadcast %62 : vector<16x1xf32> to vector<16x16xf32>
    %64 = arith.mulf %57, %63 : vector<16x16xf32>
    %65 = arith.truncf %64 : vector<16x16xf32> to vector<16x16xbf16>
    %66 = arith.truncf %32 : vector<16x128xf32> to vector<16x128xbf16>
    %cst_27 = arith.constant dense<0.000000e+00> : vector<16x128xf32>
    %67 = tpu.matmul %65, %66, %cst_27 {dimension_numbers = #tpu.dot_dimension_numbers<[1], [0], [0], [1], [0, 0, 1, 1], [], []>} : vector<16x16xbf16>, vector<16x128xbf16>, vector<16x128xf32> -> vector<16x128xf32>
    %68 = vector.broadcast %25 : vector<1x128xf32> to vector<16x128xf32>
    %69 = arith.addf %67, %68 : vector<16x128xf32>
    %70 = vector.extract_strided_slice %13 {offsets = [0, 0], sizes = [1, 128], strides = [1, 1]} : vector<8x128xf32> to vector<1x128xf32>
    %71 = vector.extract_strided_slice %13 {offsets = [1, 0], sizes = [1, 128], strides = [1, 1]} : vector<8x128xf32> to vector<1x128xf32>
    %72 = vector.extract_strided_slice %13 {offsets = [2, 0], sizes = [1, 128], strides = [1, 1]} : vector<8x128xf32> to vector<1x128xf32>
    %73 = arith.truncf %6 : vector<16x16xf32> to vector<16x16xbf16>
    %74 = arith.truncf %69 : vector<16x128xf32> to vector<16x128xbf16>
    %cst_28 = arith.constant dense<0.000000e+00> : vector<16x128xf32>
    %75 = tpu.matmul %73, %74, %cst_28 {dimension_numbers = #tpu.dot_dimension_numbers<[1], [0], [0], [1], [0, 0, 1, 1], [], []>} : vector<16x16xbf16>, vector<16x128xbf16>, vector<16x128xf32> -> vector<16x128xf32>
    %76 = vector.broadcast %72 : vector<1x128xf32> to vector<16x128xf32>
    %77 = arith.mulf %75, %76 : vector<16x128xf32>
    %78 = arith.subf %69, %77 : vector<16x128xf32>
    %79 = arith.mulf %78, %78 : vector<16x128xf32>
    %80 = arith.truncf %6 : vector<16x16xf32> to vector<16x16xbf16>
    %81 = arith.truncf %79 : vector<16x128xf32> to vector<16x128xbf16>
    %cst_29 = arith.constant dense<0.000000e+00> : vector<16x128xf32>
    %82 = tpu.matmul %80, %81, %cst_29 {dimension_numbers = #tpu.dot_dimension_numbers<[1], [0], [0], [1], [0, 0, 1, 1], [], []>} : vector<16x16xbf16>, vector<16x128xbf16>, vector<16x128xf32> -> vector<16x128xf32>
    %83 = vector.broadcast %70 : vector<1x128xf32> to vector<16x128xf32>
    %84 = arith.mulf %83, %78 : vector<16x128xf32>
    %cst_30 = arith.constant 9.99999974E-6 : f32
    %85 = vector.broadcast %cst_30 : f32 to vector<16x128xf32>
    %86 = arith.addf %82, %85 : vector<16x128xf32>
    %87 = math.rsqrt %86 : vector<16x128xf32>
    %88 = arith.mulf %84, %87 : vector<16x128xf32>
    %89 = vector.broadcast %71 : vector<1x128xf32> to vector<16x128xf32>
    %90 = arith.addf %88, %89 : vector<16x128xf32>
    %cst_31 = arith.constant 0.000000e+00 : f32
    %91 = vector.broadcast %cst_31 : f32 to vector<16x128xf32>
    %92 = arith.cmpf ogt, %90, %91 : vector<16x128xf32>
    %cst_32 = arith.constant 0.00999999977 : f32
    %93 = vector.broadcast %cst_32 : f32 to vector<16x128xf32>
    %94 = arith.mulf %93, %90 : vector<16x128xf32>
    %95 = arith.select %92, %90, %94 : vector<16x128xi1>, vector<16x128xf32>
    %96 = vector.extract_strided_slice %10 {offsets = [0, 0], sizes = [1, 128], strides = [1, 1]} : vector<16x128xf32> to vector<1x128xf32>
    %97 = vector.extract_strided_slice %10 {offsets = [1, 0], sizes = [1, 128], strides = [1, 1]} : vector<16x128xf32> to vector<1x128xf32>
    %98 = vector.extract_strided_slice %10 {offsets = [2, 0], sizes = [1, 128], strides = [1, 1]} : vector<16x128xf32> to vector<1x128xf32>
    %99 = vector.extract_strided_slice %10 {offsets = [3, 0], sizes = [1, 128], strides = [1, 1]} : vector<16x128xf32> to vector<1x128xf32>
    %100 = vector.extract_strided_slice %10 {offsets = [8, 0], sizes = [8, 128], strides = [1, 1]} : vector<16x128xf32> to vector<8x128xf32>
    %101 = arith.truncf %95 : vector<16x128xf32> to vector<16x128xbf16>
    %cst_33 = arith.constant dense<0.000000e+00> : vector<16x256xf32>
    %102 = tpu.matmul %101, %9, %cst_33 {dimension_numbers = #tpu.dot_dimension_numbers<[1], [0], [0], [1], [0, 0, 1, 1], [], []>} : vector<16x128xbf16>, vector<128x256xbf16>, vector<16x256xf32> -> vector<16x256xf32>
    %103 = vector.extract_strided_slice %102 {offsets = [0, 0], sizes = [16, 128], strides = [1, 1]} : vector<16x256xf32> to vector<16x128xf32>
    %104 = vector.broadcast %96 : vector<1x128xf32> to vector<16x128xf32>
    %105 = arith.addf %103, %104 : vector<16x128xf32>
    %106 = vector.extract_strided_slice %102 {offsets = [0, 128], sizes = [16, 128], strides = [1, 1]} : vector<16x256xf32> to vector<16x128xf32>
    %107 = vector.broadcast %97 : vector<1x128xf32> to vector<16x128xf32>
    %108 = arith.addf %106, %107 : vector<16x128xf32>
    %109 = tpu.concatenate %105, %108, %100 in 0 : vector<16x128xf32>, vector<16x128xf32>, vector<8x128xf32> -> vector<40x128xf32>
    %110 = arith.truncf %109 : vector<40x128xf32> to vector<40x128xbf16>
    %cst_34 = arith.constant dense<0.000000e+00> : vector<256x128xf32>
    %111 = tpu.matmul %0, %110, %cst_34 {dimension_numbers = #tpu.dot_dimension_numbers<[1], [0], [0], [1], [0, 0, 1, 1], [], []>} : vector<256x40xbf16>, vector<40x128xbf16>, vector<256x128xf32> -> vector<256x128xf32>
    %cst_35 = arith.constant 0.000000e+00 : f32
    %112 = vector.broadcast %cst_35 : f32 to vector<256x128xf32>
    %113 = arith.cmpf ogt, %111, %112 : vector<256x128xf32>
    %cst_36 = arith.constant 2.000000e-01 : f32
    %114 = vector.broadcast %cst_36 : f32 to vector<256x128xf32>
    %115 = arith.mulf %114, %111 : vector<256x128xf32>
    %116 = arith.select %113, %111, %115 : vector<256x128xi1>, vector<256x128xf32>
    %117 = vector.broadcast %99 : vector<1x128xf32> to vector<256x128xf32>
    %118 = arith.mulf %116, %117 : vector<256x128xf32>
    %119 = vector.shape_cast %118 : vector<256x128xf32> to vector<16x16x128xf32>
    %cst_37 = arith.constant dense<0.000000e+00> : vector<16x16xf32>
    %120 = vector.multi_reduction <add>, %119, %cst_37 [2] : vector<16x16x128xf32> to vector<16x16xf32>
    %cst_38 = arith.constant 0.000000e+00 : f32
    %121 = vector.broadcast %cst_38 : f32 to vector<16x16xf32>
    %122 = arith.cmpf ogt, %2, %121 : vector<16x16xf32>
    %cst_39 = arith.constant -1.000000e+30 : f32
    %123 = vector.broadcast %cst_39 : f32 to vector<16x16xf32>
    %124 = arith.select %122, %120, %123 : vector<16x16xi1>, vector<16x16xf32>
    %cst_40 = arith.constant dense<0xFF800000> : vector<16xf32>
    %125 = vector.multi_reduction <maximumf>, %124, %cst_40 [1] : vector<16x16xf32> to vector<16xf32>
    %126 = vector.shape_cast %125 : vector<16xf32> to vector<16x1xf32>
    %127 = vector.broadcast %126 : vector<16x1xf32> to vector<16x16xf32>
    %128 = arith.subf %124, %127 : vector<16x16xf32>
    %129 = math.exp %128 : vector<16x16xf32>
    %130 = arith.mulf %129, %2 : vector<16x16xf32>
    %cst_41 = arith.constant dense<0.000000e+00> : vector<16xf32>
    %131 = vector.multi_reduction <add>, %130, %cst_41 [1] : vector<16x16xf32> to vector<16xf32>
    %132 = vector.shape_cast %131 : vector<16xf32> to vector<16x1xf32>
    %cst_42 = arith.constant 1.000000e-30 : f32
    %133 = vector.broadcast %cst_42 : f32 to vector<16x1xf32>
    %134 = arith.maximumf %132, %133 : vector<16x1xf32>
    %135 = tpu.reciprocal %134 {approx = true} : vector<16x1xf32> -> vector<16x1xf32>
    %136 = vector.broadcast %135 : vector<16x1xf32> to vector<16x16xf32>
    %137 = arith.mulf %130, %136 : vector<16x16xf32>
    %138 = arith.truncf %137 : vector<16x16xf32> to vector<16x16xbf16>
    %139 = arith.truncf %105 : vector<16x128xf32> to vector<16x128xbf16>
    %cst_43 = arith.constant dense<0.000000e+00> : vector<16x128xf32>
    %140 = tpu.matmul %138, %139, %cst_43 {dimension_numbers = #tpu.dot_dimension_numbers<[1], [0], [0], [1], [0, 0, 1, 1], [], []>} : vector<16x16xbf16>, vector<16x128xbf16>, vector<16x128xf32> -> vector<16x128xf32>
    %141 = vector.broadcast %98 : vector<1x128xf32> to vector<16x128xf32>
    %142 = arith.addf %140, %141 : vector<16x128xf32>
    %143 = vector.extract_strided_slice %14 {offsets = [0, 0], sizes = [1, 128], strides = [1, 1]} : vector<8x128xf32> to vector<1x128xf32>
    %144 = vector.extract_strided_slice %14 {offsets = [1, 0], sizes = [1, 128], strides = [1, 1]} : vector<8x128xf32> to vector<1x128xf32>
    %145 = vector.extract_strided_slice %14 {offsets = [2, 0], sizes = [1, 128], strides = [1, 1]} : vector<8x128xf32> to vector<1x128xf32>
    %146 = arith.truncf %6 : vector<16x16xf32> to vector<16x16xbf16>
    %147 = arith.truncf %142 : vector<16x128xf32> to vector<16x128xbf16>
    %cst_44 = arith.constant dense<0.000000e+00> : vector<16x128xf32>
    %148 = tpu.matmul %146, %147, %cst_44 {dimension_numbers = #tpu.dot_dimension_numbers<[1], [0], [0], [1], [0, 0, 1, 1], [], []>} : vector<16x16xbf16>, vector<16x128xbf16>, vector<16x128xf32> -> vector<16x128xf32>
    %149 = vector.broadcast %145 : vector<1x128xf32> to vector<16x128xf32>
    %150 = arith.mulf %148, %149 : vector<16x128xf32>
    %151 = arith.subf %142, %150 : vector<16x128xf32>
    %152 = arith.mulf %151, %151 : vector<16x128xf32>
    %153 = arith.truncf %6 : vector<16x16xf32> to vector<16x16xbf16>
    %154 = arith.truncf %152 : vector<16x128xf32> to vector<16x128xbf16>
    %cst_45 = arith.constant dense<0.000000e+00> : vector<16x128xf32>
    %155 = tpu.matmul %153, %154, %cst_45 {dimension_numbers = #tpu.dot_dimension_numbers<[1], [0], [0], [1], [0, 0, 1, 1], [], []>} : vector<16x16xbf16>, vector<16x128xbf16>, vector<16x128xf32> -> vector<16x128xf32>
    %156 = vector.broadcast %143 : vector<1x128xf32> to vector<16x128xf32>
    %157 = arith.mulf %156, %151 : vector<16x128xf32>
    %cst_46 = arith.constant 9.99999974E-6 : f32
    %158 = vector.broadcast %cst_46 : f32 to vector<16x128xf32>
    %159 = arith.addf %155, %158 : vector<16x128xf32>
    %160 = math.rsqrt %159 : vector<16x128xf32>
    %161 = arith.mulf %157, %160 : vector<16x128xf32>
    %162 = vector.broadcast %144 : vector<1x128xf32> to vector<16x128xf32>
    %163 = arith.addf %161, %162 : vector<16x128xf32>
    %cst_47 = arith.constant 0.000000e+00 : f32
    %164 = vector.broadcast %cst_47 : f32 to vector<16x128xf32>
    %165 = arith.cmpf ogt, %163, %164 : vector<16x128xf32>
    %cst_48 = arith.constant 0.00999999977 : f32
    %166 = vector.broadcast %cst_48 : f32 to vector<16x128xf32>
    %167 = arith.mulf %166, %163 : vector<16x128xf32>
    %168 = arith.select %165, %163, %167 : vector<16x128xi1>, vector<16x128xf32>
    %169 = vector.extract_strided_slice %12 {offsets = [0, 0], sizes = [1, 128], strides = [1, 1]} : vector<16x128xf32> to vector<1x128xf32>
    %170 = vector.extract_strided_slice %12 {offsets = [1, 0], sizes = [1, 128], strides = [1, 1]} : vector<16x128xf32> to vector<1x128xf32>
    %171 = vector.extract_strided_slice %12 {offsets = [2, 0], sizes = [1, 128], strides = [1, 1]} : vector<16x128xf32> to vector<1x128xf32>
    %172 = vector.extract_strided_slice %12 {offsets = [3, 0], sizes = [1, 128], strides = [1, 1]} : vector<16x128xf32> to vector<1x128xf32>
    %173 = vector.extract_strided_slice %12 {offsets = [8, 0], sizes = [8, 128], strides = [1, 1]} : vector<16x128xf32> to vector<8x128xf32>
    %174 = arith.truncf %168 : vector<16x128xf32> to vector<16x128xbf16>
    %cst_49 = arith.constant dense<0.000000e+00> : vector<16x256xf32>
    %175 = tpu.matmul %174, %11, %cst_49 {dimension_numbers = #tpu.dot_dimension_numbers<[1], [0], [0], [1], [0, 0, 1, 1], [], []>} : vector<16x128xbf16>, vector<128x256xbf16>, vector<16x256xf32> -> vector<16x256xf32>
    %176 = vector.extract_strided_slice %175 {offsets = [0, 0], sizes = [16, 128], strides = [1, 1]} : vector<16x256xf32> to vector<16x128xf32>
    %177 = vector.broadcast %169 : vector<1x128xf32> to vector<16x128xf32>
    %178 = arith.addf %176, %177 : vector<16x128xf32>
    %179 = vector.extract_strided_slice %175 {offsets = [0, 128], sizes = [16, 128], strides = [1, 1]} : vector<16x256xf32> to vector<16x128xf32>
    %180 = vector.broadcast %170 : vector<1x128xf32> to vector<16x128xf32>
    %181 = arith.addf %179, %180 : vector<16x128xf32>
    %182 = tpu.concatenate %178, %181, %173 in 0 : vector<16x128xf32>, vector<16x128xf32>, vector<8x128xf32> -> vector<40x128xf32>
    %183 = arith.truncf %182 : vector<40x128xf32> to vector<40x128xbf16>
    %cst_50 = arith.constant dense<0.000000e+00> : vector<256x128xf32>
    %184 = tpu.matmul %0, %183, %cst_50 {dimension_numbers = #tpu.dot_dimension_numbers<[1], [0], [0], [1], [0, 0, 1, 1], [], []>} : vector<256x40xbf16>, vector<40x128xbf16>, vector<256x128xf32> -> vector<256x128xf32>
    %cst_51 = arith.constant 0.000000e+00 : f32
    %185 = vector.broadcast %cst_51 : f32 to vector<256x128xf32>
    %186 = arith.cmpf ogt, %184, %185 : vector<256x128xf32>
    %cst_52 = arith.constant 2.000000e-01 : f32
    %187 = vector.broadcast %cst_52 : f32 to vector<256x128xf32>
    %188 = arith.mulf %187, %184 : vector<256x128xf32>
    %189 = arith.select %186, %184, %188 : vector<256x128xi1>, vector<256x128xf32>
    %190 = vector.broadcast %172 : vector<1x128xf32> to vector<256x128xf32>
    %191 = arith.mulf %189, %190 : vector<256x128xf32>
    %192 = vector.shape_cast %191 : vector<256x128xf32> to vector<16x16x128xf32>
    %cst_53 = arith.constant dense<0.000000e+00> : vector<16x16xf32>
    %193 = vector.multi_reduction <add>, %192, %cst_53 [2] : vector<16x16x128xf32> to vector<16x16xf32>
    %cst_54 = arith.constant 0.000000e+00 : f32
    %194 = vector.broadcast %cst_54 : f32 to vector<16x16xf32>
    %195 = arith.cmpf ogt, %2, %194 : vector<16x16xf32>
    %cst_55 = arith.constant -1.000000e+30 : f32
    %196 = vector.broadcast %cst_55 : f32 to vector<16x16xf32>
    %197 = arith.select %195, %193, %196 : vector<16x16xi1>, vector<16x16xf32>
    %cst_56 = arith.constant dense<0xFF800000> : vector<16xf32>
    %198 = vector.multi_reduction <maximumf>, %197, %cst_56 [1] : vector<16x16xf32> to vector<16xf32>
    %199 = vector.shape_cast %198 : vector<16xf32> to vector<16x1xf32>
    %200 = vector.broadcast %199 : vector<16x1xf32> to vector<16x16xf32>
    %201 = arith.subf %197, %200 : vector<16x16xf32>
    %202 = math.exp %201 : vector<16x16xf32>
    %203 = arith.mulf %202, %2 : vector<16x16xf32>
    %cst_57 = arith.constant dense<0.000000e+00> : vector<16xf32>
    %204 = vector.multi_reduction <add>, %203, %cst_57 [1] : vector<16x16xf32> to vector<16xf32>
    %205 = vector.shape_cast %204 : vector<16xf32> to vector<16x1xf32>
    %cst_58 = arith.constant 1.000000e-30 : f32
    %206 = vector.broadcast %cst_58 : f32 to vector<16x1xf32>
    %207 = arith.maximumf %205, %206 : vector<16x1xf32>
    %208 = tpu.reciprocal %207 {approx = true} : vector<16x1xf32> -> vector<16x1xf32>
    %209 = vector.broadcast %208 : vector<16x1xf32> to vector<16x16xf32>
    %210 = arith.mulf %203, %209 : vector<16x16xf32>
    %211 = arith.truncf %210 : vector<16x16xf32> to vector<16x16xbf16>
    %212 = arith.truncf %178 : vector<16x128xf32> to vector<16x128xbf16>
    %cst_59 = arith.constant dense<0.000000e+00> : vector<16x128xf32>
    %213 = tpu.matmul %211, %212, %cst_59 {dimension_numbers = #tpu.dot_dimension_numbers<[1], [0], [0], [1], [0, 0, 1, 1], [], []>} : vector<16x16xbf16>, vector<16x128xbf16>, vector<16x128xf32> -> vector<16x128xf32>
    %214 = vector.broadcast %171 : vector<1x128xf32> to vector<16x128xf32>
    %215 = arith.addf %213, %214 : vector<16x128xf32>
    %216 = arith.truncf %4 : vector<8x16xf32> to vector<8x16xbf16>
    %217 = arith.truncf %215 : vector<16x128xf32> to vector<16x128xbf16>
    %cst_60 = arith.constant dense<0.000000e+00> : vector<8x128xf32>
    %218 = tpu.matmul %216, %217, %cst_60 {dimension_numbers = #tpu.dot_dimension_numbers<[1], [0], [0], [1], [0, 0, 1, 1], [], []>} : vector<8x16xbf16>, vector<16x128xbf16>, vector<8x128xf32> -> vector<8x128xf32>
    %219 = arith.truncf %218 : vector<8x128xf32> to vector<8x128xbf16>
    %cst_61 = arith.constant dense<0.000000e+00> : vector<8x128xf32>
    %220 = tpu.matmul %219, %16, %cst_61 {dimension_numbers = #tpu.dot_dimension_numbers<[1], [0], [0], [1], [0, 0, 1, 1], [], []>} : vector<8x128xbf16>, vector<128x128xbf16>, vector<8x128xf32> -> vector<8x128xf32>
    %221 = vector.broadcast %19 : vector<1x128xf32> to vector<8x128xf32>
    %222 = arith.addf %220, %221 : vector<8x128xf32>
    %cst_62 = arith.constant 0.000000e+00 : f32
    %223 = vector.broadcast %cst_62 : f32 to vector<8x128xf32>
    %224 = arith.cmpf ogt, %222, %223 : vector<8x128xf32>
    %cst_63 = arith.constant 0.00999999977 : f32
    %225 = vector.broadcast %cst_63 : f32 to vector<8x128xf32>
    %226 = arith.mulf %225, %222 : vector<8x128xf32>
    %227 = arith.select %224, %222, %226 : vector<8x128xi1>, vector<8x128xf32>
    %228 = arith.truncf %227 : vector<8x128xf32> to vector<8x128xbf16>
    %cst_64 = arith.constant dense<0.000000e+00> : vector<8x128xf32>
    %229 = tpu.matmul %228, %17, %cst_64 {dimension_numbers = #tpu.dot_dimension_numbers<[1], [0], [0], [1], [0, 0, 1, 1], [], []>} : vector<8x128xbf16>, vector<128x128xbf16>, vector<8x128xf32> -> vector<8x128xf32>
    %230 = vector.broadcast %20 : vector<1x128xf32> to vector<8x128xf32>
    %231 = arith.addf %229, %230 : vector<8x128xf32>
    %c0_65 = arith.constant 0 : index
    %c0_66 = arith.constant 0 : index
    %232 = vector.load %arg4[%c0_65, %c0_66] : memref<8x128xf32, #tpu.memory_space<vmem>>, vector<8x128xf32>
    tpu.vector_store %arg4[%c0_65, %c0_66], %231 {strides = array<i32>} : memref<8x128xf32, #tpu.memory_space<vmem>>, vector<8x128xf32>,
    return
  }
}

</mosaic_0001>

<llo_original>
// kernel: tpu_custom_call.1
$region0: #{tpu_custom_call.1}
  #allocation0 [shape = 'u32[]', space=smem, size = 0x4, offset = 0x4, fixed_abs, tag = 'smem constant byte address 0x4 - core index']
  #allocation1 [shape = 'u32[72,128]{1,0:T(1,128)}', space=vmem, size = 0x9000, scoped, tag = 'internal scratch']
  %s0 = inlined_call_operand.vmem [shape: bf16[16,128], index: 0, kind: input, shape index: {}]
  %s1 = inlined_call_operand.hbm [shape: bf16[512,256], index: 1, kind: input, shape index: {}]
  %s2 = inlined_call_operand.vmem [shape: f32[112,128], index: 2, kind: input, shape index: {}]
  %s3 = inlined_call_operand.vmem [shape: bf16[256,40], index: 3, kind: input, shape index: {}]
  %s4 = inlined_call_operand.hbm [shape: f32[8,128], index: 4, kind: output, shape index: {}]
  %s5 = sld [smem:[#allocation0]]
  $region30: #{tpu_custom_call.1} parent=0
    _
  %s7 = ssub.s32 1, %s5
  %s8 = scalar_select 0, %s7, %s5
  $region1: #{tpu_custom_call.1} parent=0
    #allocation2 [shape = 'u8[262144]{0}', space=vmem, size = 0x40000, scoped, tag = 'input window, operand 1, single buffered']
    #allocation3 [shape = 's32[1]{0}', space=sflag, size = 0x4, scoped, tag = 'scoped memory for tpu_custom_call.1']
    #allocation4 [shape = 's32[1]{0}', space=sflag, size = 0x4, scoped, tag = 'scoped memory for tpu_custom_call.1']
    #allocation5 [shape = 'u8[4096]{0}', space=vmem, size = 0x1000, scoped, tag = 'output window, operand 0, single buffered']
    %9 = vsyncpa [#allocation3], 0
    %10 = vsyncpa [#allocation4], 0
    // Predicated region
    $region2: #{tpu_custom_call.1} parent=1 // pred_check
      _
    $region3: #{tpu_custom_call.1} parent=1 // pred_check_branch
      %12 = sbr.rel (0) target = $region5
    $region4: #{tpu_custom_call.1} parent=1 // pred_region
      _
    $region5: #{tpu_custom_call.1} parent=1 // pred_fallthru
      _
    // Predicated region
    $region6: #{tpu_custom_call.1} parent=1 // pred_check
      _
    $region7: #{tpu_custom_call.1} parent=1 // pred_check_branch
      %14 = sbr.rel (0) target = $region9
    $region8: #{tpu_custom_call.1} parent=1 // pred_region
      %16 = vsyncadd [#allocation3], 0
      %s17 = sshll.u32 %s1, 4
      %s18 = int_to_ptr.hbm [resolvable:$true] %s17
      %s19 = sshll.u32 [#allocation2], 4
      %s20 = int_to_ptr.vmem [resolvable:$true] %s19
      %25 = dma.hbm_to_vmem [thread:$0]  %s18, 8192, %s20, [#allocation3], 128, 128, 8
    $region9: #{tpu_custom_call.1} parent=1 // pred_fallthru
      _
    // Predicated region
    $region10: #{tpu_custom_call.1} parent=1 // pred_check
      _
    $region11: #{tpu_custom_call.1} parent=1 // pred_check_branch
      %27 = sbr.rel (0) target = $region13
    $region12: #{tpu_custom_call.1} parent=1 // pred_region
      _
    $region13: #{tpu_custom_call.1} parent=1 // pred_fallthru
      _
    // Predicated region
    $region14: #{tpu_custom_call.1} parent=1 // pred_check
      _
    $region15: #{tpu_custom_call.1} parent=1 // pred_check_branch
      %29 = sbr.rel (0) target = $region17
    $region16: #{tpu_custom_call.1} parent=1 // pred_region
      _
    $region17: #{tpu_custom_call.1} parent=1 // pred_fallthru
      _
    // Predicated region
    $region18: #{tpu_custom_call.1} parent=1 // pred_check
      _
    $region19: #{tpu_custom_call.1} parent=1 // pred_check_branch
      %31 = sbr.rel (0) target = $region21
    $region20: #{tpu_custom_call.1} parent=1 // pred_region
      %33 = dma.done [#allocation3], 8192
    $region21: #{tpu_custom_call.1} parent=1 // pred_fallthru
      _
    %v35 = vld [vmem:[%s3] sm:$0xf]
    %v36 = vld [vmem:[%s3 + $0x4] sm:$0xf]
    %v37 = vld [vmem:[%s3 + $0x8] sm:$0xf]
    %v38 = vld [vmem:[%s3 + $0xc] sm:$0xf]
    %v39 = vld [vmem:[%s3 + $0x10] sm:$0xf]
    %v40 = vld [vmem:[%s3 + $0x14] sm:$0xf]
    %v41 = vld [vmem:[%s3 + $0x18] sm:$0xf]
    %v42 = vld [vmem:[%s3 + $0x1c] sm:$0xf]
    %v43 = vld [vmem:[%s3 + $0x20] sm:$0xf]
    %v44 = vld [vmem:[%s3 + $0x24] sm:$0xf]
    %v45 = vld [vmem:[%s3 + $0x28] sm:$0xf]
    %v46 = vld [vmem:[%s3 + $0x2c] sm:$0xf]
    %v47 = vld [vmem:[%s3 + $0x30] sm:$0xf]
    %v48 = vld [vmem:[%s3 + $0x34] sm:$0xf]
    %v49 = vld [vmem:[%s3 + $0x38] sm:$0xf]
    %v50 = vld [vmem:[%s3 + $0x3c] sm:$0xf]
    %v51 = vld [vmem:[%s3 + $0x40] sm:$0xf]
    %v52 = vld [vmem:[%s3 + $0x44] sm:$0xf]
    %v53 = vld [vmem:[%s3 + $0x48] sm:$0xf]
    %v54 = vld [vmem:[%s3 + $0x4c] sm:$0xf]
    %v55 = vld [vmem:[%s3 + $0x50] sm:$0xf]
    %v56 = vld [vmem:[%s3 + $0x54] sm:$0xf]
    %v57 = vld [vmem:[%s3 + $0x58] sm:$0xf]
    %v58 = vld [vmem:[%s3 + $0x5c] sm:$0xf]
    %v59 = vld [vmem:[%s3 + $0x60] sm:$0xf]
    %v60 = vld [vmem:[%s3 + $0x64] sm:$0xf]
    %v61 = vld [vmem:[%s3 + $0x68] sm:$0xf]
    %v62 = vld [vmem:[%s3 + $0x6c] sm:$0xf]
    %v63 = vld [vmem:[%s3 + $0x70] sm:$0xf]
    %v64 = vld [vmem:[%s3 + $0x74] sm:$0xf]
    %v65 = vld [vmem:[%s3 + $0x78] sm:$0xf]
    %v66 = vld [vmem:[%s3 + $0x7c] sm:$0xf]
    %v67 = vld [vmem:[%s2 + $0x48] sm:$0xff]
    %v68 = vld [vmem:[%s2 + $0x50] sm:$0xff]
    %v69 = vld [vmem:[%s2 + $0x58] sm:$0xff]
    %v70 = vld [vmem:[%s2 + $0x60] sm:$0xff]
    %v71 = vld [vmem:[%s2 + $0x68] sm:$0xff]
    %v72 = vld [vmem:[#allocation2] sm:$0xff]
    %v73 = vld [vmem:[#allocation2 + $0x8] sm:$0xff]
    %v74 = vld [vmem:[#allocation2 + $0x10] sm:$0xff]
    %v75 = vld [vmem:[#allocation2 + $0x18] sm:$0xff]
    %v76 = vld [vmem:[#allocation2 + $0x20] sm:$0xff]
    %v77 = vld [vmem:[#allocation2 + $0x28] sm:$0xff]
    %v78 = vld [vmem:[#allocation2 + $0x30] sm:$0xff]
    %v79 = vld [vmem:[#allocation2 + $0x38] sm:$0xff]
    %v80 = vld [vmem:[#allocation2 + $0x40] sm:$0xff]
    %v81 = vld [vmem:[#allocation2 + $0x48] sm:$0xff]
    %v82 = vld [vmem:[#allocation2 + $0x50] sm:$0xff]
    %v83 = vld [vmem:[#allocation2 + $0x58] sm:$0xff]
    %v84 = vld [vmem:[#allocation2 + $0x60] sm:$0xff]
    %v85 = vld [vmem:[#allocation2 + $0x68] sm:$0xff]
    %v86 = vld [vmem:[#allocation2 + $0x70] sm:$0xff]
    %v87 = vld [vmem:[#allocation2 + $0x78] sm:$0xff]
    %v88 = vld [vmem:[%s2] sm:$0xff]
    %v89 = vld [vmem:[%s2 + $0x8] sm:$0xff]
    %v90 = vld [vmem:[#allocation2 + $0x80] sm:$0xff]
    %v91 = vld [vmem:[#allocation2 + $0x88] sm:$0xff]
    %v92 = vld [vmem:[#allocation2 + $0x90] sm:$0xff]
    %v93 = vld [vmem:[#allocation2 + $0x98] sm:$0xff]
    %v94 = vld [vmem:[#allocation2 + $0xa0] sm:$0xff]
    %v95 = vld [vmem:[#allocation2 + $0xa8] sm:$0xff]
    %v96 = vld [vmem:[#allocation2 + $0xb0] sm:$0xff]
    %v97 = vld [vmem:[#allocation2 + $0xb8] sm:$0xff]
    %v98 = vld [vmem:[#allocation2 + $0xc0] sm:$0xff]
    %v99 = vld [vmem:[#allocation2 + $0xc8] sm:$0xff]
    %v100 = vld [vmem:[#allocation2 + $0xd0] sm:$0xff]
    %v101 = vld [vmem:[#allocation2 + $0xd8] sm:$0xff]
    %v102 = vld [vmem:[#allocation2 + $0xe0] sm:$0xff]
    %v103 = vld [vmem:[#allocation2 + $0xe8] sm:$0xff]
    %v104 = vld [vmem:[#allocation2 + $0xf0] sm:$0xff]
    %v105 = vld [vmem:[#allocation2 + $0xf8] sm:$0xff]
    %v106 = vld [vmem:[%s2 + $0x10] sm:$0xff]
    %v107 = vld [vmem:[%s2 + $0x18] sm:$0xff]
    %v108 = vld [vmem:[#allocation2 + $0x100] sm:$0xff]
    %v109 = vld [vmem:[#allocation2 + $0x108] sm:$0xff]
    %v110 = vld [vmem:[#allocation2 + $0x110] sm:$0xff]
    %v111 = vld [vmem:[#allocation2 + $0x118] sm:$0xff]
    %v112 = vld [vmem:[#allocation2 + $0x120] sm:$0xff]
    %v113 = vld [vmem:[#allocation2 + $0x128] sm:$0xff]
    %v114 = vld [vmem:[#allocation2 + $0x130] sm:$0xff]
    %v115 = vld [vmem:[#allocation2 + $0x138] sm:$0xff]
    %v116 = vld [vmem:[#allocation2 + $0x140] sm:$0xff]
    %v117 = vld [vmem:[#allocation2 + $0x148] sm:$0xff]
    %v118 = vld [vmem:[#allocation2 + $0x150] sm:$0xff]
    %v119 = vld [vmem:[#allocation2 + $0x158] sm:$0xff]
    %v120 = vld [vmem:[#allocation2 + $0x160] sm:$0xff]
    %v121 = vld [vmem:[#allocation2 + $0x168] sm:$0xff]
    %v122 = vld [vmem:[#allocation2 + $0x170] sm:$0xff]
    %v123 = vld [vmem:[#allocation2 + $0x178] sm:$0xff]
    %v124 = vld [vmem:[%s2 + $0x20] sm:$0xff]
    %v125 = vld [vmem:[%s2 + $0x28] sm:$0xff]
    %v126 = vld [vmem:[%s2 + $0x30] sm:$0xff]
    %v127 = vld [vmem:[%s2 + $0x38] sm:$0xff]
    %v128 = vld [vmem:[#allocation2 + $0x180] sm:$0xff]
    %v129 = vld [vmem:[#allocation2 + $0x188] sm:$0xff]
    %v130 = vld [vmem:[#allocation2 + $0x190] sm:$0xff]
    %v131 = vld [vmem:[#allocation2 + $0x198] sm:$0xff]
    %v132 = vld [vmem:[#allocation2 + $0x1a0] sm:$0xff]
    %v133 = vld [vmem:[#allocation2 + $0x1a8] sm:$0xff]
    %v134 = vld [vmem:[#allocation2 + $0x1b0] sm:$0xff]
    %v135 = vld [vmem:[#allocation2 + $0x1b8] sm:$0xff]
    %v136 = vld [vmem:[#allocation2 + $0x1c0] sm:$0xff]
    %v137 = vld [vmem:[#allocation2 + $0x1c8] sm:$0xff]
    %v138 = vld [vmem:[#allocation2 + $0x1d0] sm:$0xff]
    %v139 = vld [vmem:[#allocation2 + $0x1d8] sm:$0xff]
    %v140 = vld [vmem:[#allocation2 + $0x1e0] sm:$0xff]
    %v141 = vld [vmem:[#allocation2 + $0x1e8] sm:$0xff]
    %v142 = vld [vmem:[#allocation2 + $0x1f0] sm:$0xff]
    %v143 = vld [vmem:[#allocation2 + $0x1f8] sm:$0xff]
    %v144 = vld [vmem:[%s2 + $0x40] sm:$0xff]
    %v145 = vld [vmem:[%s0] sm:$0xf]
    %v146 = vld [vmem:[%s0 + $0x4] sm:$0xf]
    %v149 = vunpack.c.l.b16 %v145
    %v150 = vunpack.c.l.b16 %v146
    %v151 = vpack.c.b16 %v150, %v149
    %v169 = vunpack.c.l.b16 %v72
    %v170 = vunpack.c.h.b16 %v72
    %v171 = vunpack.c.l.b16 %v73
    %v172 = vunpack.c.h.b16 %v73
    %v173 = vunpack.c.l.b16 %v74
    %v174 = vunpack.c.h.b16 %v74
    %v175 = vunpack.c.l.b16 %v75
    %v176 = vunpack.c.h.b16 %v75
    %v177 = vunpack.c.l.b16 %v76
    %v178 = vunpack.c.h.b16 %v76
    %v179 = vunpack.c.l.b16 %v77
    %v180 = vunpack.c.h.b16 %v77
    %v181 = vunpack.c.l.b16 %v78
    %v182 = vunpack.c.h.b16 %v78
    %v183 = vunpack.c.l.b16 %v79
    %v184 = vunpack.c.h.b16 %v79
    %v185 = vunpack.c.l.b16 %v80
    %v186 = vunpack.c.h.b16 %v80
    %v187 = vunpack.c.l.b16 %v81
    %v188 = vunpack.c.h.b16 %v81
    %v189 = vunpack.c.l.b16 %v82
    %v190 = vunpack.c.h.b16 %v82
    %v191 = vunpack.c.l.b16 %v83
    %v192 = vunpack.c.h.b16 %v83
    %v193 = vunpack.c.l.b16 %v84
    %v194 = vunpack.c.h.b16 %v84
    %v195 = vunpack.c.l.b16 %v85
    %v196 = vunpack.c.h.b16 %v85
    %v197 = vunpack.c.l.b16 %v86
    %v198 = vunpack.c.h.b16 %v86
    %v199 = vunpack.c.l.b16 %v87
    %v200 = vunpack.c.h.b16 %v87
    %v201 = vpack.c.b16 %v171, %v169
    %v202 = vpack.c.b16 %v172, %v170
    %v203 = vpack.c.b16 %v175, %v173
    %v204 = vpack.c.b16 %v176, %v174
    %v205 = vpack.c.b16 %v179, %v177
    %v206 = vpack.c.b16 %v180, %v178
    %v207 = vpack.c.b16 %v183, %v181
    %v208 = vpack.c.b16 %v184, %v182
    %v209 = vpack.c.b16 %v187, %v185
    %v210 = vpack.c.b16 %v188, %v186
    %v211 = vpack.c.b16 %v191, %v189
    %v212 = vpack.c.b16 %v192, %v190
    %v213 = vpack.c.b16 %v195, %v193
    %v214 = vpack.c.b16 %v196, %v194
    %v215 = vpack.c.b16 %v199, %v197
    %v216 = vpack.c.b16 %v200, %v198
    %233 = vmatpush.bf16.msra.mxu0 %v215
    %234 = vmatpush.bf16.msra.mxu0 %v213
    %235 = vmatpush.bf16.msra.mxu0 %v211
    %236 = vmatpush.bf16.msra.mxu0 %v209
    %237 = vmatpush.bf16.msra.mxu0 %v207
    %238 = vmatpush.bf16.msra.mxu0 %v205
    %239 = vmatpush.bf16.msra.mxu0 %v203
    %240 = vmatpush.bf16.msra.mxu0 %v201
    %241 = vmatmul.bf16.gmra.mxu0 %v151
    %v242 = vpop.f32.mrf.mxu0
    %v243 = vadd.f32 0.0, %v242
    %v244 = vpop.f32.mrf.mxu0
    %v245 = vadd.f32 0.0, %v244
    %246 = vdwg.mxu0
    %247 = vmatpush.bf16.msra.mxu0 %v216
    %248 = vmatpush.bf16.msra.mxu0 %v214
    %249 = vmatpush.bf16.msra.mxu0 %v212
    %250 = vmatpush.bf16.msra.mxu0 %v210
    %251 = vmatpush.bf16.msra.mxu0 %v208
    %252 = vmatpush.bf16.msra.mxu0 %v206
    %253 = vmatpush.bf16.msra.mxu0 %v204
    %254 = vmatpush.bf16.msra.mxu0 %v202
    %255 = vmatmul.bf16.gmra.mxu0 %v151
    %v256 = vpop.f32.mrf.mxu0
    %v257 = vadd.f32 0.0, %v256
    %v258 = vpop.f32.mrf.mxu0
    %v259 = vadd.f32 0.0, %v258
    %260 = vdwg.mxu0
    %v261 = vperm.slane %v88, 0
    %v262 = vadd.f32 %v243, %v261
    %v263 = vadd.f32 %v245, %v261
    %v264 = vperm.slane %v88, 1
    %v265 = vadd.f32 %v257, %v264
    %v266 = vadd.f32 %v259, %v264
    %v267 = vpack.c.bf16 %v263, %v262
    %v268 = vpack.c.bf16 %v266, %v265
    %v269 = vpack.c.bf16 %v89, %v89
    %v302 = vunpack.c.l.b16 %v35
    %v303 = vunpack.c.l.b16 %v36
    %v304 = vunpack.c.l.b16 %v37
    %v305 = vunpack.c.l.b16 %v38
    %v306 = vunpack.c.l.b16 %v39
    %v307 = vunpack.c.l.b16 %v40
    %v308 = vunpack.c.l.b16 %v41
    %v309 = vunpack.c.l.b16 %v42
    %v310 = vunpack.c.l.b16 %v43
    %v311 = vunpack.c.l.b16 %v44
    %v312 = vunpack.c.l.b16 %v45
    %v313 = vunpack.c.l.b16 %v46
    %v314 = vunpack.c.l.b16 %v47
    %v315 = vunpack.c.l.b16 %v48
    %v316 = vunpack.c.l.b16 %v49
    %v317 = vunpack.c.l.b16 %v50
    %v318 = vunpack.c.l.b16 %v51
    %v319 = vunpack.c.l.b16 %v52
    %v320 = vunpack.c.l.b16 %v53
    %v321 = vunpack.c.l.b16 %v54
    %v322 = vunpack.c.l.b16 %v55
    %v323 = vunpack.c.l.b16 %v56
    %v324 = vunpack.c.l.b16 %v57
    %v325 = vunpack.c.l.b16 %v58
    %v326 = vunpack.c.l.b16 %v59
    %v327 = vunpack.c.l.b16 %v60
    %v328 = vunpack.c.l.b16 %v61
    %v329 = vunpack.c.l.b16 %v62
    %v330 = vunpack.c.l.b16 %v63
    %v331 = vunpack.c.l.b16 %v64
    %v332 = vunpack.c.l.b16 %v65
    %v333 = vunpack.c.l.b16 %v66
    %v334 = vpack.c.b16 %v303, %v302
    %v335 = vpack.c.b16 %v305, %v304
    %v336 = vpack.c.b16 %v307, %v306
    %v337 = vpack.c.b16 %v309, %v308
    %v338 = vpack.c.b16 %v311, %v310
    %v339 = vpack.c.b16 %v313, %v312
    %v340 = vpack.c.b16 %v315, %v314
    %v341 = vpack.c.b16 %v317, %v316
    %v342 = vpack.c.b16 %v319, %v318
    %v343 = vpack.c.b16 %v321, %v320
    %v344 = vpack.c.b16 %v323, %v322
    %v345 = vpack.c.b16 %v325, %v324
    %v346 = vpack.c.b16 %v327, %v326
    %v347 = vpack.c.b16 %v329, %v328
    %v348 = vpack.c.b16 %v331, %v330
    %v349 = vpack.c.b16 %v333, %v332
    %vm350 = vcmask 326656
    %v352 = vsel %vm350, %v334, 0
    %v355 = vsel %vm350, %v335, 0
    %v358 = vsel %vm350, %v336, 0
    %v361 = vsel %vm350, %v337, 0
    %v364 = vsel %vm350, %v338, 0
    %v367 = vsel %vm350, %v339, 0
    %v370 = vsel %vm350, %v340, 0
    %v373 = vsel %vm350, %v341, 0
    %v376 = vsel %vm350, %v342, 0
    %v379 = vsel %vm350, %v343, 0
    %v382 = vsel %vm350, %v344, 0
    %v385 = vsel %vm350, %v345, 0
    %v388 = vsel %vm350, %v346, 0
    %v391 = vsel %vm350, %v347, 0
    %v394 = vsel %vm350, %v348, 0
    %v397 = vsel %vm350, %v349, 0
    %vm399 = vcmask 1043456
    %v401 = vsel %vm399, %v269, 0
    %403 = vmatpush.bf16.msra.mxu0 0
    %404 = vmatpush.bf16.msra.mxu0 0
    %405 = vmatpush.bf16.msra.mxu0 0
    %406 = vmatpush.bf16.msra.mxu0 0
    %407 = vmatpush.bf16.msra.mxu0 0
    %408 = vmatpush.bf16.msra.mxu0 %v401
    %409 = vmatpush.bf16.msra.mxu0 %v268
    %410 = vmatpush.bf16.msra.mxu0 %v267
    %411 = vmatmul.bf16.gmra.mxu0 %v352
    %v412 = vpop.f32.mrf.mxu0
    %v413 = vadd.f32 0.0, %v412
    %v414 = vpop.f32.mrf.mxu0
    %v415 = vadd.f32 0.0, %v414
    %416 = vmatmul.bf16.gmra.mxu0 %v355
    %v417 = vpop.f32.mrf.mxu0
    %v418 = vadd.f32 0.0, %v417
    %v419 = vpop.f32.mrf.mxu0
    %v420 = vadd.f32 0.0, %v419
    %421 = vmatmul.bf16.gmra.mxu0 %v358
    %v422 = vpop.f32.mrf.mxu0
    %v423 = vadd.f32 0.0, %v422
    %v424 = vpop.f32.mrf.mxu0
    %v425 = vadd.f32 0.0, %v424
    %426 = vmatmul.bf16.gmra.mxu0 %v361
    %v427 = vpop.f32.mrf.mxu0
    %v428 = vadd.f32 0.0, %v427
    %v429 = vpop.f32.mrf.mxu0
    %v430 = vadd.f32 0.0, %v429
    %431 = vmatmul.bf16.gmra.mxu0 %v364
    %v432 = vpop.f32.mrf.mxu0
    %v433 = vadd.f32 0.0, %v432
    %v434 = vpop.f32.mrf.mxu0
    %v435 = vadd.f32 0.0, %v434
    %436 = vmatmul.bf16.gmra.mxu0 %v367
    %v437 = vpop.f32.mrf.mxu0
    %v438 = vadd.f32 0.0, %v437
    %v439 = vpop.f32.mrf.mxu0
    %v440 = vadd.f32 0.0, %v439
    %441 = vmatmul.bf16.gmra.mxu0 %v370
    %v442 = vpop.f32.mrf.mxu0
    %v443 = vadd.f32 0.0, %v442
    %v444 = vpop.f32.mrf.mxu0
    %v445 = vadd.f32 0.0, %v444
    %446 = vmatmul.bf16.gmra.mxu0 %v373
    %v447 = vpop.f32.mrf.mxu0
    %v448 = vadd.f32 0.0, %v447
    %v449 = vpop.f32.mrf.mxu0
    %v450 = vadd.f32 0.0, %v449
    %451 = vmatmul.bf16.gmra.mxu0 %v376
    %v452 = vpop.f32.mrf.mxu0
    %v453 = vadd.f32 0.0, %v452
    %v454 = vpop.f32.mrf.mxu0
    %v455 = vadd.f32 0.0, %v454
    %456 = vmatmul.bf16.gmra.mxu0 %v379
    %v457 = vpop.f32.mrf.mxu0
    %v458 = vadd.f32 0.0, %v457
    %v459 = vpop.f32.mrf.mxu0
    %v460 = vadd.f32 0.0, %v459
    %461 = vmatmul.bf16.gmra.mxu0 %v382
    %v462 = vpop.f32.mrf.mxu0
    %v463 = vadd.f32 0.0, %v462
    %v464 = vpop.f32.mrf.mxu0
    %v465 = vadd.f32 0.0, %v464
    %466 = vmatmul.bf16.gmra.mxu0 %v385
    %v467 = vpop.f32.mrf.mxu0
    %v468 = vadd.f32 0.0, %v467
    %v469 = vpop.f32.mrf.mxu0
    %v470 = vadd.f32 0.0, %v469
    %471 = vmatmul.bf16.gmra.mxu0 %v388
    %v472 = vpop.f32.mrf.mxu0
    %v473 = vadd.f32 0.0, %v472
    %v474 = vpop.f32.mrf.mxu0
    %v475 = vadd.f32 0.0, %v474
    %476 = vmatmul.bf16.gmra.mxu0 %v391
    %v477 = vpop.f32.mrf.mxu0
    %v478 = vadd.f32 0.0, %v477
    %v479 = vpop.f32.mrf.mxu0
    %v480 = vadd.f32 0.0, %v479
    %481 = vmatmul.bf16.gmra.mxu0 %v394
    %v482 = vpop.f32.mrf.mxu0
    %v483 = vadd.f32 0.0, %v482
    %v484 = vpop.f32.mrf.mxu0
    %v485 = vadd.f32 0.0, %v484
    %486 = vmatmul.bf16.gmra.mxu0 %v397
    %v487 = vpop.f32.mrf.mxu0
    %v488 = vadd.f32 0.0, %v487
    %v489 = vpop.f32.mrf.mxu0
    %v490 = vadd.f32 0.0, %v489
    %491 = vdwg.mxu0
    %vm492 = vcmp.gt.f32.partialorder %v413, 0.0
    %vm493 = vcmp.gt.f32.partialorder %v415, 0.0
    %vm494 = vcmp.gt.f32.partialorder %v418, 0.0
    %vm495 = vcmp.gt.f32.partialorder %v420, 0.0
    %vm496 = vcmp.gt.f32.partialorder %v423, 0.0
    %vm497 = vcmp.gt.f32.partialorder %v425, 0.0
    %vm498 = vcmp.gt.f32.partialorder %v428, 0.0
    %vm499 = vcmp.gt.f32.partialorder %v430, 0.0
    %vm500 = vcmp.gt.f32.partialorder %v433, 0.0
    %vm501 = vcmp.gt.f32.partialorder %v435, 0.0
    %vm502 = vcmp.gt.f32.partialorder %v438, 0.0
    %vm503 = vcmp.gt.f32.partialorder %v440, 0.0
    %vm504 = vcmp.gt.f32.partialorder %v443, 0.0
    %vm505 = vcmp.gt.f32.partialorder %v445, 0.0
    %vm506 = vcmp.gt.f32.partialorder %v448, 0.0
    %vm507 = vcmp.gt.f32.partialorder %v450, 0.0
    %vm508 = vcmp.gt.f32.partialorder %v453, 0.0
    %vm509 = vcmp.gt.f32.partialorder %v455, 0.0
    %vm510 = vcmp.gt.f32.partialorder %v458, 0.0
    %vm511 = vcmp.gt.f32.partialorder %v460, 0.0
    %vm512 = vcmp.gt.f32.partialorder %v463, 0.0
    %vm513 = vcmp.gt.f32.partialorder %v465, 0.0
    %vm514 = vcmp.gt.f32.partialorder %v468, 0.0
    %vm515 = vcmp.gt.f32.partialorder %v470, 0.0
    %vm516 = vcmp.gt.f32.partialorder %v473, 0.0
    %vm517 = vcmp.gt.f32.partialorder %v475, 0.0
    %vm518 = vcmp.gt.f32.partialorder %v478, 0.0
    %vm519 = vcmp.gt.f32.partialorder %v480, 0.0
    %vm520 = vcmp.gt.f32.partialorder %v483, 0.0
    %vm521 = vcmp.gt.f32.partialorder %v485, 0.0
    %vm522 = vcmp.gt.f32.partialorder %v488, 0.0
    %vm523 = vcmp.gt.f32.partialorder %v490, 0.0
    %v524 = vmul.f32 %v413, 0.2
    %v525 = vmul.f32 %v415, 0.2
    %v526 = vmul.f32 %v418, 0.2
    %v527 = vmul.f32 %v420, 0.2
    %v528 = vmul.f32 %v423, 0.2
    %v529 = vmul.f32 %v425, 0.2
    %v530 = vmul.f32 %v428, 0.2
    %v531 = vmul.f32 %v430, 0.2
    %v532 = vmul.f32 %v433, 0.2
    %v533 = vmul.f32 %v435, 0.2
    %v534 = vmul.f32 %v438, 0.2
    %v535 = vmul.f32 %v440, 0.2
    %v536 = vmul.f32 %v443, 0.2
    %v537 = vmul.f32 %v445, 0.2
    %v538 = vmul.f32 %v448, 0.2
    %v539 = vmul.f32 %v450, 0.2
    %v540 = vmul.f32 %v453, 0.2
    %v541 = vmul.f32 %v455, 0.2
    %v542 = vmul.f32 %v458, 0.2
    %v543 = vmul.f32 %v460, 0.2
    %v544 = vmul.f32 %v463, 0.2
    %v545 = vmul.f32 %v465, 0.2
    %v546 = vmul.f32 %v468, 0.2
    %v547 = vmul.f32 %v470, 0.2
    %v548 = vmul.f32 %v473, 0.2
    %v549 = vmul.f32 %v475, 0.2
    %v550 = vmul.f32 %v478, 0.2
    %v551 = vmul.f32 %v480, 0.2
    %v552 = vmul.f32 %v483, 0.2
    %v553 = vmul.f32 %v485, 0.2
    %v554 = vmul.f32 %v488, 0.2
    %v555 = vmul.f32 %v490, 0.2
    %v556 = vsel %vm492, %v413, %v524
    %v557 = vsel %vm493, %v415, %v525
    %v558 = vsel %vm494, %v418, %v526
    %v559 = vsel %vm495, %v420, %v527
    %v560 = vsel %vm496, %v423, %v528
    %v561 = vsel %vm497, %v425, %v529
    %v562 = vsel %vm498, %v428, %v530
    %v563 = vsel %vm499, %v430, %v531
    %v564 = vsel %vm500, %v433, %v532
    %v565 = vsel %vm501, %v435, %v533
    %v566 = vsel %vm502, %v438, %v534
    %v567 = vsel %vm503, %v440, %v535
    %v568 = vsel %vm504, %v443, %v536
    %v569 = vsel %vm505, %v445, %v537
    %v570 = vsel %vm506, %v448, %v538
    %v571 = vsel %vm507, %v450, %v539
    %v572 = vsel %vm508, %v453, %v540
    %v573 = vsel %vm509, %v455, %v541
    %v574 = vsel %vm510, %v458, %v542
    %v575 = vsel %vm511, %v460, %v543
    %v576 = vsel %vm512, %v463, %v544
    %v577 = vsel %vm513, %v465, %v545
    %v578 = vsel %vm514, %v468, %v546
    %v579 = vsel %vm515, %v470, %v547
    %v580 = vsel %vm516, %v473, %v548
    %v581 = vsel %vm517, %v475, %v549
    %v582 = vsel %vm518, %v478, %v550
    %v583 = vsel %vm519, %v480, %v551
    %v584 = vsel %vm520, %v483, %v552
    %v585 = vsel %vm521, %v485, %v553
    %v586 = vsel %vm522, %v488, %v554
    %v587 = vsel %vm523, %v490, %v555
    %v588 = vperm.slane %v88, 3
    %v589 = vmul.f32 %v556, %v588
    %v590 = vmul.f32 %v557, %v588
    %v591 = vmul.f32 %v558, %v588
    %v592 = vmul.f32 %v559, %v588
    %v593 = vmul.f32 %v560, %v588
    %v594 = vmul.f32 %v561, %v588
    %v595 = vmul.f32 %v562, %v588
    %v596 = vmul.f32 %v563, %v588
    %v597 = vmul.f32 %v564, %v588
    %v598 = vmul.f32 %v565, %v588
    %v599 = vmul.f32 %v566, %v588
    %v600 = vmul.f32 %v567, %v588
    %v601 = vmul.f32 %v568, %v588
    %v602 = vmul.f32 %v569, %v588
    %v603 = vmul.f32 %v570, %v588
    %v604 = vmul.f32 %v571, %v588
    %v605 = vmul.f32 %v572, %v588
    %v606 = vmul.f32 %v573, %v588
    %v607 = vmul.f32 %v574, %v588
    %v608 = vmul.f32 %v575, %v588
    %v609 = vmul.f32 %v576, %v588
    %v610 = vmul.f32 %v577, %v588
    %v611 = vmul.f32 %v578, %v588
    %v612 = vmul.f32 %v579, %v588
    %v613 = vmul.f32 %v580, %v588
    %v614 = vmul.f32 %v581, %v588
    %v615 = vmul.f32 %v582, %v588
    %v616 = vmul.f32 %v583, %v588
    %v617 = vmul.f32 %v584, %v588
    %v618 = vmul.f32 %v585, %v588
    %v619 = vmul.f32 %v586, %v588
    %v620 = vmul.f32 %v587, %v588
    %621 = vadd.xlane.f32.xlu0 %v589
    %v622 = vpop.xlane.xlu0 %621
    %623 = vadd.xlane.f32.xlu0 %v590
    %v624 = vpop.xlane.xlu0 %623
    %625 = vadd.xlane.f32.xlu0 %v591
    %v626 = vpop.xlane.xlu0 %625
    %627 = vadd.xlane.f32.xlu0 %v592
    %v628 = vpop.xlane.xlu0 %627
    %629 = vadd.xlane.f32.xlu0 %v593
    %v630 = vpop.xlane.xlu0 %629
    %631 = vadd.xlane.f32.xlu0 %v594
    %v632 = vpop.xlane.xlu0 %631
    %633 = vadd.xlane.f32.xlu0 %v595
    %v634 = vpop.xlane.xlu0 %633
    %635 = vadd.xlane.f32.xlu0 %v596
    %v636 = vpop.xlane.xlu0 %635
    %637 = vadd.xlane.f32.xlu0 %v597
    %v638 = vpop.xlane.xlu0 %637
    %639 = vadd.xlane.f32.xlu0 %v598
    %v640 = vpop.xlane.xlu0 %639
    %641 = vadd.xlane.f32.xlu0 %v599
    %v642 = vpop.xlane.xlu0 %641
    %643 = vadd.xlane.f32.xlu0 %v600
    %v644 = vpop.xlane.xlu0 %643
    %645 = vadd.xlane.f32.xlu0 %v601
    %v646 = vpop.xlane.xlu0 %645
    %647 = vadd.xlane.f32.xlu0 %v602
    %v648 = vpop.xlane.xlu0 %647
    %649 = vadd.xlane.f32.xlu0 %v603
    %v650 = vpop.xlane.xlu0 %649
    %651 = vadd.xlane.f32.xlu0 %v604
    %v652 = vpop.xlane.xlu0 %651
    %653 = vadd.xlane.f32.xlu0 %v605
    %v654 = vpop.xlane.xlu0 %653
    %655 = vadd.xlane.f32.xlu0 %v606
    %v656 = vpop.xlane.xlu0 %655
    %657 = vadd.xlane.f32.xlu0 %v607
    %v658 = vpop.xlane.xlu0 %657
    %659 = vadd.xlane.f32.xlu0 %v608
    %v660 = vpop.xlane.xlu0 %659
    %661 = vadd.xlane.f32.xlu0 %v609
    %v662 = vpop.xlane.xlu0 %661
    %663 = vadd.xlane.f32.xlu0 %v610
    %v664 = vpop.xlane.xlu0 %663
    %665 = vadd.xlane.f32.xlu0 %v611
    %v666 = vpop.xlane.xlu0 %665
    %667 = vadd.xlane.f32.xlu0 %v612
    %v668 = vpop.xlane.xlu0 %667
    %669 = vadd.xlane.f32.xlu0 %v613
    %v670 = vpop.xlane.xlu0 %669
    %671 = vadd.xlane.f32.xlu0 %v614
    %v672 = vpop.xlane.xlu0 %671
    %673 = vadd.xlane.f32.xlu0 %v615
    %v674 = vpop.xlane.xlu0 %673
    %675 = vadd.xlane.f32.xlu0 %v616
    %v676 = vpop.xlane.xlu0 %675
    %677 = vadd.xlane.f32.xlu0 %v617
    %v678 = vpop.xlane.xlu0 %677
    %679 = vadd.xlane.f32.xlu0 %v618
    %v680 = vpop.xlane.xlu0 %679
    %681 = vadd.xlane.f32.xlu0 %v619
    %v682 = vpop.xlane.xlu0 %681
    %683 = vadd.xlane.f32.xlu0 %v620
    %v684 = vpop.xlane.xlu0 %683
    %vm685 = vcmp.gt.f32.partialorder %v67, 0.0
    %vm686 = vcmp.gt.f32.partialorder %v68, 0.0
    %v719 = vlaneseq
    %v720 = vand.u32 %v719, 127
    %v721 = vperm.slane %v622, %v720
    %v722 = vadd.s32 %v720, 4294967288
    %v723 = vperm.slane %v624, %v722
    %vm724 = vcmask 130112
    %v725 = vsel %vm724, %v723, %v721
    %v726 = vperm.slane %v626, %v720
    %v727 = vperm.slane %v628, %v722
    %v728 = vsel %vm724, %v727, %v726
    %v729 = vperm.slane %v630, %v720
    %v730 = vperm.slane %v632, %v722
    %v731 = vsel %vm724, %v730, %v729
    %v732 = vperm.slane %v634, %v720
    %v733 = vperm.slane %v636, %v722
    %v734 = vsel %vm724, %v733, %v732
    %v735 = vperm.slane %v638, %v720
    %v736 = vperm.slane %v640, %v722
    %v737 = vsel %vm724, %v736, %v735
    %v738 = vperm.slane %v642, %v720
    %v739 = vperm.slane %v644, %v722
    %v740 = vsel %vm724, %v739, %v738
    %v741 = vperm.slane %v646, %v720
    %v742 = vperm.slane %v648, %v722
    %v743 = vsel %vm724, %v742, %v741
    %v744 = vperm.slane %v650, %v720
    %v745 = vperm.slane %v652, %v722
    %v746 = vsel %vm724, %v745, %v744
    %v747 = vperm.slane %v654, %v720
    %v748 = vperm.slane %v656, %v722
    %v749 = vsel %vm724, %v748, %v747
    %v750 = vperm.slane %v658, %v720
    %v751 = vperm.slane %v660, %v722
    %v752 = vsel %vm724, %v751, %v750
    %v753 = vperm.slane %v662, %v720
    %v754 = vperm.slane %v664, %v722
    %v755 = vsel %vm724, %v754, %v753
    %v756 = vperm.slane %v666, %v720
    %v757 = vperm.slane %v668, %v722
    %v758 = vsel %vm724, %v757, %v756
    %v759 = vperm.slane %v670, %v720
    %v760 = vperm.slane %v672, %v722
    %v761 = vsel %vm724, %v760, %v759
    %v762 = vperm.slane %v674, %v720
    %v763 = vperm.slane %v676, %v722
    %v764 = vsel %vm724, %v763, %v762
    %v765 = vperm.slane %v678, %v720
    %v766 = vperm.slane %v680, %v722
    %v767 = vsel %vm724, %v766, %v765
    %v768 = vperm.slane %v682, %v720
    %v769 = vperm.slane %v684, %v722
    %v770 = vsel %vm724, %v769, %v768
    %vm771 = vcmask 1041409
    %v772 = vsel %vm771, %v728, %v725
    %vm773 = vcmask 1042434
    %v774 = vsel %vm773, %v731, %v772
    %vm775 = vcmask 1043459
    %v776 = vsel %vm775, %v734, %v774
    %vm777 = vcmask 1044484
    %v778 = vsel %vm777, %v737, %v776
    %vm779 = vcmask 1045509
    %v780 = vsel %vm779, %v740, %v778
    %vm781 = vcmask 1046534
    %v782 = vsel %vm781, %v743, %v780
    %vm783 = vcmask 1047559
    %v784 = vsel %vm783, %v746, %v782
    %v785 = vsel %vm771, %v752, %v749
    %v786 = vsel %vm773, %v755, %v785
    %v787 = vsel %vm775, %v758, %v786
    %v788 = vsel %vm777, %v761, %v787
    %v789 = vsel %vm779, %v764, %v788
    %v790 = vsel %vm781, %v767, %v789
    %v791 = vsel %vm783, %v770, %v790
    %v794 = vsel %vm685, %v784, -1e+30
    %v795 = vsel %vm686, %v791, -1e+30
    %vm796 = vcmask 130048
    %v797 = vsel %vm796, %v794, -inf
    %798 = vmax.xlane.f32.xlu0 %v797
    %v799 = vpop.xlane.xlu0 %798
    %v800 = vsel %vm796, %v795, -inf
    %801 = vmax.xlane.f32.xlu0 %v800
    %v802 = vpop.xlane.xlu0 %801
    %v803 = vsub.f32 %v794, %v799
    %v804 = vsub.f32 %v795, %v802
    %v805 = vmul.f32 %v803, 1.442695
    %v806 = vpow.pop %v805
    %v807 = vmul.f32 %v804, 1.442695
    %v808 = vpow.pop %v807
    %v809 = vmul.f32 %v806, %v67
    %v810 = vmul.f32 %v808, %v68
    %v811 = vsel %vm796, %v809, 0.0
    %812 = vadd.xlane.f32.xlu0 %v811
    %v813 = vpop.xlane.xlu0 %812
    %v814 = vsel %vm796, %v810, 0.0
    %815 = vadd.xlane.f32.xlu0 %v814
    %v816 = vpop.xlane.xlu0 %815
    %v817 = vmax.f32 %v813, 1e-30
    %v818 = vmax.f32 %v816, 1e-30
    %v819 = vrcp.pop %v817
    %v820 = vrcp.pop %v818
    %v821 = vmul.f32 %v809, %v819
    %v822 = vmul.f32 %v810, %v820
    %v823 = vpack.c.bf16 %v822, %v821
    %v824 = vperm.slane %v88, 2
    %v826 = vsel %vm796, %v823, 0
    %828 = vmatpush.bf16.msra.mxu0 0
    %829 = vmatpush.bf16.msra.mxu0 0
    %830 = vmatpush.bf16.msra.mxu0 0
    %831 = vmatpush.bf16.msra.mxu0 0
    %832 = vmatpush.bf16.msra.mxu0 0
    %833 = vmatpush.bf16.msra.mxu0 0
    %834 = vmatpush.bf16.msra.mxu0 0
    %835 = vmatpush.bf16.msra.mxu0 %v267
    %836 = vmatmul.bf16.gmra.mxu0 %v826
    %v837 = vpop.f32.mrf.mxu0
    %v838 = vadd.f32 %v824, %v837
    %v839 = vpop.f32.mrf.mxu0
    %v840 = vadd.f32 %v824, %v839
    %841 = vdwg.mxu0
    %v842 = vpack.c.bf16 %v71, %v70
    %v843 = vpack.c.bf16 %v840, %v838
    %v845 = vsel %vm796, %v842, 0
    %847 = vmatpush.bf16.msra.mxu0 0
    %848 = vmatpush.bf16.msra.mxu0 0
    %849 = vmatpush.bf16.msra.mxu0 0
    %850 = vmatpush.bf16.msra.mxu0 0
    %851 = vmatpush.bf16.msra.mxu0 0
    %852 = vmatpush.bf16.msra.mxu0 0
    %853 = vmatpush.bf16.msra.mxu0 0
    %854 = vmatpush.bf16.msra.mxu0 %v843
    %855 = vmatmul.bf16.gmra.mxu0 %v845
    %v856 = vpop.f32.mrf.mxu0
    %v857 = vadd.f32 0.0, %v856
    %v858 = vpop.f32.mrf.mxu0
    %v859 = vadd.f32 0.0, %v858
    %860 = vdwg.mxu0
    %v861 = vperm.slane %v126, 2
    %v862 = vmul.f32 %v857, %v861
    %v863 = vmul.f32 %v859, %v861
    %v864 = vsub.f32 %v838, %v862
    %v865 = vsub.f32 %v840, %v863
    %v866 = vmul.f32 %v864, %v864
    %v867 = vmul.f32 %v865, %v865
    %v868 = vpack.c.bf16 %v867, %v866
    %v869 = vperm.slane %v126, 0
    %v870 = vmul.f32 %v869, %v864
    %v871 = vmul.f32 %v869, %v865
    %872 = vmatpush.bf16.msra.mxu0 0
    %873 = vmatpush.bf16.msra.mxu0 0
    %874 = vmatpush.bf16.msra.mxu0 0
    %875 = vmatpush.bf16.msra.mxu0 0
    %876 = vmatpush.bf16.msra.mxu0 0
    %877 = vmatpush.bf16.msra.mxu0 0
    %878 = vmatpush.bf16.msra.mxu0 0
    %879 = vmatpush.bf16.msra.mxu0 %v868
    %880 = vmatmul.bf16.gmra.mxu0 %v845
    %v881 = vpop.f32.mrf.mxu0
    %v882 = vadd.f32 1e-05, %v881
    %v883 = vpop.f32.mrf.mxu0
    %v884 = vadd.f32 1e-05, %v883
    %885 = vdwg.mxu0
    %v886 = vrsqrt.pop %v882
    %v887 = vmul.f32 %v886, %v882
    %v888 = vmul.f32 %v887, %v886
    %v889 = vmul.f32 0.5, %v888
    %v890 = vsub.f32 1.5, %v889
    %v891 = vmul.f32 %v886, %v890
    %vm892 = vweird.f32 %v882
    %vm893 = vweird.f32 %v886
    %vm894 = vmor %vm892, %vm893
    %v895 = vsel %vm894, %v886, %v891
    %v896 = vrsqrt.pop %v884
    %v897 = vmul.f32 %v896, %v884
    %v898 = vmul.f32 %v897, %v896
    %v899 = vmul.f32 0.5, %v898
    %v900 = vsub.f32 1.5, %v899
    %v901 = vmul.f32 %v896, %v900
    %vm902 = vweird.f32 %v884
    %vm903 = vweird.f32 %v896
    %vm904 = vmor %vm902, %vm903
    %v905 = vsel %vm904, %v896, %v901
    %v906 = vmul.f32 %v870, %v895
    %v907 = vmul.f32 %v871, %v905
    %v908 = vperm.slane %v126, 1
    %v909 = vadd.f32 %v906, %v908
    %v910 = vadd.f32 %v907, %v908
    %vm911 = vcmp.gt.f32.partialorder %v909, 0.0
    %vm912 = vcmp.gt.f32.partialorder %v910, 0.0
    %v913 = vmul.f32 %v909, 0.01
    %v914 = vmul.f32 %v910, 0.01
    %v915 = vsel %vm911, %v909, %v913
    %v916 = vsel %vm912, %v910, %v914
    %v917 = vpack.c.bf16 %v916, %v915
    %v934 = vunpack.c.l.b16 %v90
    %v935 = vunpack.c.h.b16 %v90
    %v936 = vunpack.c.l.b16 %v91
    %v937 = vunpack.c.h.b16 %v91
    %v938 = vunpack.c.l.b16 %v92
    %v939 = vunpack.c.h.b16 %v92
    %v940 = vunpack.c.l.b16 %v93
    %v941 = vunpack.c.h.b16 %v93
    %v942 = vunpack.c.l.b16 %v94
    %v943 = vunpack.c.h.b16 %v94
    %v944 = vunpack.c.l.b16 %v95
    %v945 = vunpack.c.h.b16 %v95
    %v946 = vunpack.c.l.b16 %v96
    %v947 = vunpack.c.h.b16 %v96
    %v948 = vunpack.c.l.b16 %v97
    %v949 = vunpack.c.h.b16 %v97
    %v950 = vunpack.c.l.b16 %v98
    %v951 = vunpack.c.h.b16 %v98
    %v952 = vunpack.c.l.b16 %v99
    %v953 = vunpack.c.h.b16 %v99
    %v954 = vunpack.c.l.b16 %v100
    %v955 = vunpack.c.h.b16 %v100
    %v956 = vunpack.c.l.b16 %v101
    %v957 = vunpack.c.h.b16 %v101
    %v958 = vunpack.c.l.b16 %v102
    %v959 = vunpack.c.h.b16 %v102
    %v960 = vunpack.c.l.b16 %v103
    %v961 = vunpack.c.h.b16 %v103
    %v962 = vunpack.c.l.b16 %v104
    %v963 = vunpack.c.h.b16 %v104
    %v964 = vunpack.c.l.b16 %v105
    %v965 = vunpack.c.h.b16 %v105
    %v966 = vpack.c.b16 %v936, %v934
    %v967 = vpack.c.b16 %v937, %v935
    %v968 = vpack.c.b16 %v940, %v938
    %v969 = vpack.c.b16 %v941, %v939
    %v970 = vpack.c.b16 %v944, %v942
    %v971 = vpack.c.b16 %v945, %v943
    %v972 = vpack.c.b16 %v948, %v946
    %v973 = vpack.c.b16 %v949, %v947
    %v974 = vpack.c.b16 %v952, %v950
    %v975 = vpack.c.b16 %v953, %v951
    %v976 = vpack.c.b16 %v956, %v954
    %v977 = vpack.c.b16 %v957, %v955
    %v978 = vpack.c.b16 %v960, %v958
    %v979 = vpack.c.b16 %v961, %v959
    %v980 = vpack.c.b16 %v964, %v962
    %v981 = vpack.c.b16 %v965, %v963
    %998 = vmatpush.bf16.msra.mxu0 %v980
    %999 = vmatpush.bf16.msra.mxu0 %v978
    %1000 = vmatpush.bf16.msra.mxu0 %v976
    %1001 = vmatpush.bf16.msra.mxu0 %v974
    %1002 = vmatpush.bf16.msra.mxu0 %v972
    %1003 = vmatpush.bf16.msra.mxu0 %v970
    %1004 = vmatpush.bf16.msra.mxu0 %v968
    %1005 = vmatpush.bf16.msra.mxu0 %v966
    %1006 = vmatmul.bf16.gmra.mxu0 %v917
    %v1007 = vpop.f32.mrf.mxu0
    %v1008 = vadd.f32 0.0, %v1007
    %v1009 = vpop.f32.mrf.mxu0
    %v1010 = vadd.f32 0.0, %v1009
    %1011 = vdwg.mxu0
    %1012 = vmatpush.bf16.msra.mxu0 %v981
    %1013 = vmatpush.bf16.msra.mxu0 %v979
    %1014 = vmatpush.bf16.msra.mxu0 %v977
    %1015 = vmatpush.bf16.msra.mxu0 %v975
    %1016 = vmatpush.bf16.msra.mxu0 %v973
    %1017 = vmatpush.bf16.msra.mxu0 %v971
    %1018 = vmatpush.bf16.msra.mxu0 %v969
    %1019 = vmatpush.bf16.msra.mxu0 %v967
    %1020 = vmatmul.bf16.gmra.mxu0 %v917
    %v1021 = vpop.f32.mrf.mxu0
    %v1022 = vadd.f32 0.0, %v1021
    %v1023 = vpop.f32.mrf.mxu0
    %v1024 = vadd.f32 0.0, %v1023
    %1025 = vdwg.mxu0
    %v1026 = vperm.slane %v106, 0
    %v1027 = vadd.f32 %v1008, %v1026
    %v1028 = vadd.f32 %v1010, %v1026
    %v1029 = vperm.slane %v106, 1
    %v1030 = vadd.f32 %v1022, %v1029
    %v1031 = vadd.f32 %v1024, %v1029
    %v1032 = vpack.c.bf16 %v1028, %v1027
    %v1033 = vpack.c.bf16 %v1031, %v1030
    %v1034 = vpack.c.bf16 %v107, %v107
    %v1036 = vsel %vm399, %v1034, 0
    %1038 = vmatpush.bf16.msra.mxu0 0
    %1039 = vmatpush.bf16.msra.mxu0 0
    %1040 = vmatpush.bf16.msra.mxu0 0
    %1041 = vmatpush.bf16.msra.mxu0 0
    %1042 = vmatpush.bf16.msra.mxu0 0
    %1043 = vmatpush.bf16.msra.mxu0 %v1036
    %1044 = vmatpush.bf16.msra.mxu0 %v1033
    %1045 = vmatpush.bf16.msra.mxu0 %v1032
    %1046 = vmatmul.bf16.gmra.mxu0 %v352
    %v1047 = vpop.f32.mrf.mxu0
    %v1048 = vadd.f32 0.0, %v1047
    %v1049 = vpop.f32.mrf.mxu0
    %v1050 = vadd.f32 0.0, %v1049
    %1051 = vmatmul.bf16.gmra.mxu0 %v355
    %v1052 = vpop.f32.mrf.mxu0
    %v1053 = vadd.f32 0.0, %v1052
    %v1054 = vpop.f32.mrf.mxu0
    %v1055 = vadd.f32 0.0, %v1054
    %1056 = vmatmul.bf16.gmra.mxu0 %v358
    %v1057 = vpop.f32.mrf.mxu0
    %v1058 = vadd.f32 0.0, %v1057
    %v1059 = vpop.f32.mrf.mxu0
    %v1060 = vadd.f32 0.0, %v1059
    %1061 = vmatmul.bf16.gmra.mxu0 %v361
    %v1062 = vpop.f32.mrf.mxu0
    %v1063 = vadd.f32 0.0, %v1062
    %v1064 = vpop.f32.mrf.mxu0
    %v1065 = vadd.f32 0.0, %v1064
    %1066 = vmatmul.bf16.gmra.mxu0 %v364
    %v1067 = vpop.f32.mrf.mxu0
    %v1068 = vadd.f32 0.0, %v1067
    %v1069 = vpop.f32.mrf.mxu0
    %v1070 = vadd.f32 0.0, %v1069
    %1071 = vmatmul.bf16.gmra.mxu0 %v367
    %v1072 = vpop.f32.mrf.mxu0
    %v1073 = vadd.f32 0.0, %v1072
    %v1074 = vpop.f32.mrf.mxu0
    %v1075 = vadd.f32 0.0, %v1074
    %1076 = vmatmul.bf16.gmra.mxu0 %v370
    %v1077 = vpop.f32.mrf.mxu0
    %v1078 = vadd.f32 0.0, %v1077
    %v1079 = vpop.f32.mrf.mxu0
    %v1080 = vadd.f32 0.0, %v1079
    %1081 = vmatmul.bf16.gmra.mxu0 %v373
    %v1082 = vpop.f32.mrf.mxu0
    %v1083 = vadd.f32 0.0, %v1082
    %v1084 = vpop.f32.mrf.mxu0
    %v1085 = vadd.f32 0.0, %v1084
    %1086 = vmatmul.bf16.gmra.mxu0 %v376
    %v1087 = vpop.f32.mrf.mxu0
    %v1088 = vadd.f32 0.0, %v1087
    %v1089 = vpop.f32.mrf.mxu0
    %v1090 = vadd.f32 0.0, %v1089
    %1091 = vmatmul.bf16.gmra.mxu0 %v379
    %v1092 = vpop.f32.mrf.mxu0
    %v1093 = vadd.f32 0.0, %v1092
    %v1094 = vpop.f32.mrf.mxu0
    %v1095 = vadd.f32 0.0, %v1094
    %1096 = vmatmul.bf16.gmra.mxu0 %v382
    %v1097 = vpop.f32.mrf.mxu0
    %v1098 = vadd.f32 0.0, %v1097
    %v1099 = vpop.f32.mrf.mxu0
    %v1100 = vadd.f32 0.0, %v1099
    %1101 = vmatmul.bf16.gmra.mxu0 %v385
    %v1102 = vpop.f32.mrf.mxu0
    %v1103 = vadd.f32 0.0, %v1102
    %v1104 = vpop.f32.mrf.mxu0
    %v1105 = vadd.f32 0.0, %v1104
    %1106 = vmatmul.bf16.gmra.mxu0 %v388
    %v1107 = vpop.f32.mrf.mxu0
    %v1108 = vadd.f32 0.0, %v1107
    %v1109 = vpop.f32.mrf.mxu0
    %v1110 = vadd.f32 0.0, %v1109
    %1111 = vmatmul.bf16.gmra.mxu0 %v391
    %v1112 = vpop.f32.mrf.mxu0
    %v1113 = vadd.f32 0.0, %v1112
    %v1114 = vpop.f32.mrf.mxu0
    %v1115 = vadd.f32 0.0, %v1114
    %1116 = vmatmul.bf16.gmra.mxu0 %v394
    %v1117 = vpop.f32.mrf.mxu0
    %v1118 = vadd.f32 0.0, %v1117
    %v1119 = vpop.f32.mrf.mxu0
    %v1120 = vadd.f32 0.0, %v1119
    %1121 = vmatmul.bf16.gmra.mxu0 %v397
    %v1122 = vpop.f32.mrf.mxu0
    %v1123 = vadd.f32 0.0, %v1122
    %v1124 = vpop.f32.mrf.mxu0
    %v1125 = vadd.f32 0.0, %v1124
    %1126 = vdwg.mxu0
    %vm1127 = vcmp.gt.f32.partialorder %v1048, 0.0
    %vm1128 = vcmp.gt.f32.partialorder %v1050, 0.0
    %vm1129 = vcmp.gt.f32.partialorder %v1053, 0.0
    %vm1130 = vcmp.gt.f32.partialorder %v1055, 0.0
    %vm1131 = vcmp.gt.f32.partialorder %v1058, 0.0
    %vm1132 = vcmp.gt.f32.partialorder %v1060, 0.0
    %vm1133 = vcmp.gt.f32.partialorder %v1063, 0.0
    %vm1134 = vcmp.gt.f32.partialorder %v1065, 0.0
    %vm1135 = vcmp.gt.f32.partialorder %v1068, 0.0
    %vm1136 = vcmp.gt.f32.partialorder %v1070, 0.0
    %vm1137 = vcmp.gt.f32.partialorder %v1073, 0.0
    %vm1138 = vcmp.gt.f32.partialorder %v1075, 0.0
    %vm1139 = vcmp.gt.f32.partialorder %v1078, 0.0
    %vm1140 = vcmp.gt.f32.partialorder %v1080, 0.0
    %vm1141 = vcmp.gt.f32.partialorder %v1083, 0.0
    %vm1142 = vcmp.gt.f32.partialorder %v1085, 0.0
    %vm1143 = vcmp.gt.f32.partialorder %v1088, 0.0
    %vm1144 = vcmp.gt.f32.partialorder %v1090, 0.0
    %vm1145 = vcmp.gt.f32.partialorder %v1093, 0.0
    %vm1146 = vcmp.gt.f32.partialorder %v1095, 0.0
    %vm1147 = vcmp.gt.f32.partialorder %v1098, 0.0
    %vm1148 = vcmp.gt.f32.partialorder %v1100, 0.0
    %vm1149 = vcmp.gt.f32.partialorder %v1103, 0.0
    %vm1150 = vcmp.gt.f32.partialorder %v1105, 0.0
    %vm1151 = vcmp.gt.f32.partialorder %v1108, 0.0
    %vm1152 = vcmp.gt.f32.partialorder %v1110, 0.0
    %vm1153 = vcmp.gt.f32.partialorder %v1113, 0.0
    %vm1154 = vcmp.gt.f32.partialorder %v1115, 0.0
    %vm1155 = vcmp.gt.f32.partialorder %v1118, 0.0
    %vm1156 = vcmp.gt.f32.partialorder %v1120, 0.0
    %vm1157 = vcmp.gt.f32.partialorder %v1123, 0.0
    %vm1158 = vcmp.gt.f32.partialorder %v1125, 0.0
    %v1159 = vmul.f32 %v1048, 0.2
    %v1160 = vmul.f32 %v1050, 0.2
    %v1161 = vmul.f32 %v1053, 0.2
    %v1162 = vmul.f32 %v1055, 0.2
    %v1163 = vmul.f32 %v1058, 0.2
    %v1164 = vmul.f32 %v1060, 0.2
    %v1165 = vmul.f32 %v1063, 0.2
    %v1166 = vmul.f32 %v1065, 0.2
    %v1167 = vmul.f32 %v1068, 0.2
    %v1168 = vmul.f32 %v1070, 0.2
    %v1169 = vmul.f32 %v1073, 0.2
    %v1170 = vmul.f32 %v1075, 0.2
    %v1171 = vmul.f32 %v1078, 0.2
    %v1172 = vmul.f32 %v1080, 0.2
    %v1173 = vmul.f32 %v1083, 0.2
    %v1174 = vmul.f32 %v1085, 0.2
    %v1175 = vmul.f32 %v1088, 0.2
    %v1176 = vmul.f32 %v1090, 0.2
    %v1177 = vmul.f32 %v1093, 0.2
    %v1178 = vmul.f32 %v1095, 0.2
    %v1179 = vmul.f32 %v1098, 0.2
    %v1180 = vmul.f32 %v1100, 0.2
    %v1181 = vmul.f32 %v1103, 0.2
    %v1182 = vmul.f32 %v1105, 0.2
    %v1183 = vmul.f32 %v1108, 0.2
    %v1184 = vmul.f32 %v1110, 0.2
    %v1185 = vmul.f32 %v1113, 0.2
    %v1186 = vmul.f32 %v1115, 0.2
    %v1187 = vmul.f32 %v1118, 0.2
    %v1188 = vmul.f32 %v1120, 0.2
    %v1189 = vmul.f32 %v1123, 0.2
    %v1190 = vmul.f32 %v1125, 0.2
    %v1191 = vsel %vm1127, %v1048, %v1159
    %v1192 = vsel %vm1128, %v1050, %v1160
    %v1193 = vsel %vm1129, %v1053, %v1161
    %v1194 = vsel %vm1130, %v1055, %v1162
    %v1195 = vsel %vm1131, %v1058, %v1163
    %v1196 = vsel %vm1132, %v1060, %v1164
    %v1197 = vsel %vm1133, %v1063, %v1165
    %v1198 = vsel %vm1134, %v1065, %v1166
    %v1199 = vsel %vm1135, %v1068, %v1167
    %v1200 = vsel %vm1136, %v1070, %v1168
    %v1201 = vsel %vm1137, %v1073, %v1169
    %v1202 = vsel %vm1138, %v1075, %v1170
    %v1203 = vsel %vm1139, %v1078, %v1171
    %v1204 = vsel %vm1140, %v1080, %v1172
    %v1205 = vsel %vm1141, %v1083, %v1173
    %v1206 = vsel %vm1142, %v1085, %v1174
    %v1207 = vsel %vm1143, %v1088, %v1175
    %v1208 = vsel %vm1144, %v1090, %v1176
    %v1209 = vsel %vm1145, %v1093, %v1177
    %v1210 = vsel %vm1146, %v1095, %v1178
    %v1211 = vsel %vm1147, %v1098, %v1179
    %v1212 = vsel %vm1148, %v1100, %v1180
    %v1213 = vsel %vm1149, %v1103, %v1181
    %v1214 = vsel %vm1150, %v1105, %v1182
    %v1215 = vsel %vm1151, %v1108, %v1183
    %v1216 = vsel %vm1152, %v1110, %v1184
    %v1217 = vsel %vm1153, %v1113, %v1185
    %v1218 = vsel %vm1154, %v1115, %v1186
    %v1219 = vsel %vm1155, %v1118, %v1187
    %v1220 = vsel %vm1156, %v1120, %v1188
    %v1221 = vsel %vm1157, %v1123, %v1189
    %v1222 = vsel %vm1158, %v1125, %v1190
    %v1223 = vperm.slane %v106, 3
    %v1224 = vmul.f32 %v1191, %v1223
    %v1225 = vmul.f32 %v1192, %v1223
    %v1226 = vmul.f32 %v1193, %v1223
    %v1227 = vmul.f32 %v1194, %v1223
    %v1228 = vmul.f32 %v1195, %v1223
    %v1229 = vmul.f32 %v1196, %v1223
    %v1230 = vmul.f32 %v1197, %v1223
    %v1231 = vmul.f32 %v1198, %v1223
    %v1232 = vmul.f32 %v1199, %v1223
    %v1233 = vmul.f32 %v1200, %v1223
    %v1234 = vmul.f32 %v1201, %v1223
    %v1235 = vmul.f32 %v1202, %v1223
    %v1236 = vmul.f32 %v1203, %v1223
    %v1237 = vmul.f32 %v1204, %v1223
    %v1238 = vmul.f32 %v1205, %v1223
    %v1239 = vmul.f32 %v1206, %v1223
    %v1240 = vmul.f32 %v1207, %v1223
    %v1241 = vmul.f32 %v1208, %v1223
    %v1242 = vmul.f32 %v1209, %v1223
    %v1243 = vmul.f32 %v1210, %v1223
    %v1244 = vmul.f32 %v1211, %v1223
    %v1245 = vmul.f32 %v1212, %v1223
    %v1246 = vmul.f32 %v1213, %v1223
    %v1247 = vmul.f32 %v1214, %v1223
    %v1248 = vmul.f32 %v1215, %v1223
    %v1249 = vmul.f32 %v1216, %v1223
    %v1250 = vmul.f32 %v1217, %v1223
    %v1251 = vmul.f32 %v1218, %v1223
    %v1252 = vmul.f32 %v1219, %v1223
    %v1253 = vmul.f32 %v1220, %v1223
    %v1254 = vmul.f32 %v1221, %v1223
    %v1255 = vmul.f32 %v1222, %v1223
    %1256 = vadd.xlane.f32.xlu0 %v1224
    %v1257 = vpop.xlane.xlu0 %1256
    %1258 = vadd.xlane.f32.xlu0 %v1225
    %v1259 = vpop.xlane.xlu0 %1258
    %1260 = vadd.xlane.f32.xlu0 %v1226
    %v1261 = vpop.xlane.xlu0 %1260
    %1262 = vadd.xlane.f32.xlu0 %v1227
    %v1263 = vpop.xlane.xlu0 %1262
    %1264 = vadd.xlane.f32.xlu0 %v1228
    %v1265 = vpop.xlane.xlu0 %1264
    %1266 = vadd.xlane.f32.xlu0 %v1229
    %v1267 = vpop.xlane.xlu0 %1266
    %1268 = vadd.xlane.f32.xlu0 %v1230
    %v1269 = vpop.xlane.xlu0 %1268
    %1270 = vadd.xlane.f32.xlu0 %v1231
    %v1271 = vpop.xlane.xlu0 %1270
    %1272 = vadd.xlane.f32.xlu0 %v1232
    %v1273 = vpop.xlane.xlu0 %1272
    %1274 = vadd.xlane.f32.xlu0 %v1233
    %v1275 = vpop.xlane.xlu0 %1274
    %1276 = vadd.xlane.f32.xlu0 %v1234
    %v1277 = vpop.xlane.xlu0 %1276
    %1278 = vadd.xlane.f32.xlu0 %v1235
    %v1279 = vpop.xlane.xlu0 %1278
    %1280 = vadd.xlane.f32.xlu0 %v1236
    %v1281 = vpop.xlane.xlu0 %1280
    %1282 = vadd.xlane.f32.xlu0 %v1237
    %v1283 = vpop.xlane.xlu0 %1282
    %1284 = vadd.xlane.f32.xlu0 %v1238
    %v1285 = vpop.xlane.xlu0 %1284
    %1286 = vadd.xlane.f32.xlu0 %v1239
    %v1287 = vpop.xlane.xlu0 %1286
    %1288 = vadd.xlane.f32.xlu0 %v1240
    %v1289 = vpop.xlane.xlu0 %1288
    %1290 = vadd.xlane.f32.xlu0 %v1241
    %v1291 = vpop.xlane.xlu0 %1290
    %1292 = vadd.xlane.f32.xlu0 %v1242
    %v1293 = vpop.xlane.xlu0 %1292
    %1294 = vadd.xlane.f32.xlu0 %v1243
    %v1295 = vpop.xlane.xlu0 %1294
    %1296 = vadd.xlane.f32.xlu0 %v1244
    %v1297 = vpop.xlane.xlu0 %1296
    %1298 = vadd.xlane.f32.xlu0 %v1245
    %v1299 = vpop.xlane.xlu0 %1298
    %1300 = vadd.xlane.f32.xlu0 %v1246
    %v1301 = vpop.xlane.xlu0 %1300
    %1302 = vadd.xlane.f32.xlu0 %v1247
    %v1303 = vpop.xlane.xlu0 %1302
    %1304 = vadd.xlane.f32.xlu0 %v1248
    %v1305 = vpop.xlane.xlu0 %1304
    %1306 = vadd.xlane.f32.xlu0 %v1249
    %v1307 = vpop.xlane.xlu0 %1306
    %1308 = vadd.xlane.f32.xlu0 %v1250
    %v1309 = vpop.xlane.xlu0 %1308
    %1310 = vadd.xlane.f32.xlu0 %v1251
    %v1311 = vpop.xlane.xlu0 %1310
    %1312 = vadd.xlane.f32.xlu0 %v1252
    %v1313 = vpop.xlane.xlu0 %1312
    %1314 = vadd.xlane.f32.xlu0 %v1253
    %v1315 = vpop.xlane.xlu0 %1314
    %1316 = vadd.xlane.f32.xlu0 %v1254
    %v1317 = vpop.xlane.xlu0 %1316
    %1318 = vadd.xlane.f32.xlu0 %v1255
    %v1319 = vpop.xlane.xlu0 %1318
    %v1352 = vperm.slane %v1257, %v720
    %v1353 = vperm.slane %v1259, %v722
    %v1354 = vsel %vm724, %v1353, %v1352
    %v1355 = vperm.slane %v1261, %v720
    %v1356 = vperm.slane %v1263, %v722
    %v1357 = vsel %vm724, %v1356, %v1355
    %v1358 = vperm.slane %v1265, %v720
    %v1359 = vperm.slane %v1267, %v722
    %v1360 = vsel %vm724, %v1359, %v1358
    %v1361 = vperm.slane %v1269, %v720
    %v1362 = vperm.slane %v1271, %v722
    %v1363 = vsel %vm724, %v1362, %v1361
    %v1364 = vperm.slane %v1273, %v720
    %v1365 = vperm.slane %v1275, %v722
    %v1366 = vsel %vm724, %v1365, %v1364
    %v1367 = vperm.slane %v1277, %v720
    %v1368 = vperm.slane %v1279, %v722
    %v1369 = vsel %vm724, %v1368, %v1367
    %v1370 = vperm.slane %v1281, %v720
    %v1371 = vperm.slane %v1283, %v722
    %v1372 = vsel %vm724, %v1371, %v1370
    %v1373 = vperm.slane %v1285, %v720
    %v1374 = vperm.slane %v1287, %v722
    %v1375 = vsel %vm724, %v1374, %v1373
    %v1376 = vperm.slane %v1289, %v720
    %v1377 = vperm.slane %v1291, %v722
    %v1378 = vsel %vm724, %v1377, %v1376
    %v1379 = vperm.slane %v1293, %v720
    %v1380 = vperm.slane %v1295, %v722
    %v1381 = vsel %vm724, %v1380, %v1379
    %v1382 = vperm.slane %v1297, %v720
    %v1383 = vperm.slane %v1299, %v722
    %v1384 = vsel %vm724, %v1383, %v1382
    %v1385 = vperm.slane %v1301, %v720
    %v1386 = vperm.slane %v1303, %v722
    %v1387 = vsel %vm724, %v1386, %v1385
    %v1388 = vperm.slane %v1305, %v720
    %v1389 = vperm.slane %v1307, %v722
    %v1390 = vsel %vm724, %v1389, %v1388
    %v1391 = vperm.slane %v1309, %v720
    %v1392 = vperm.slane %v1311, %v722
    %v1393 = vsel %vm724, %v1392, %v1391
    %v1394 = vperm.slane %v1313, %v720
    %v1395 = vperm.slane %v1315, %v722
    %v1396 = vsel %vm724, %v1395, %v1394
    %v1397 = vperm.slane %v1317, %v720
    %v1398 = vperm.slane %v1319, %v722
    %v1399 = vsel %vm724, %v1398, %v1397
    %v1400 = vsel %vm771, %v1357, %v1354
    %v1401 = vsel %vm773, %v1360, %v1400
    %v1402 = vsel %vm775, %v1363, %v1401
    %v1403 = vsel %vm777, %v1366, %v1402
    %v1404 = vsel %vm779, %v1369, %v1403
    %v1405 = vsel %vm781, %v1372, %v1404
    %v1406 = vsel %vm783, %v1375, %v1405
    %v1407 = vsel %vm771, %v1381, %v1378
    %v1408 = vsel %vm773, %v1384, %v1407
    %v1409 = vsel %vm775, %v1387, %v1408
    %v1410 = vsel %vm777, %v1390, %v1409
    %v1411 = vsel %vm779, %v1393, %v1410
    %v1412 = vsel %vm781, %v1396, %v1411
    %v1413 = vsel %vm783, %v1399, %v1412
    %v1416 = vsel %vm685, %v1406, -1e+30
    %v1417 = vsel %vm686, %v1413, -1e+30
    %v1418 = vsel %vm796, %v1416, -inf
    %1419 = vmax.xlane.f32.xlu0 %v1418
    %v1420 = vpop.xlane.xlu0 %1419
    %v1421 = vsel %vm796, %v1417, -inf
    %1422 = vmax.xlane.f32.xlu0 %v1421
    %v1423 = vpop.xlane.xlu0 %1422
    %v1424 = vsub.f32 %v1416, %v1420
    %v1425 = vsub.f32 %v1417, %v1423
    %v1426 = vmul.f32 %v1424, 1.442695
    %v1427 = vpow.pop %v1426
    %v1428 = vmul.f32 %v1425, 1.442695
    %v1429 = vpow.pop %v1428
    %v1430 = vmul.f32 %v1427, %v67
    %v1431 = vmul.f32 %v1429, %v68
    %v1432 = vsel %vm796, %v1430, 0.0
    %1433 = vadd.xlane.f32.xlu0 %v1432
    %v1434 = vpop.xlane.xlu0 %1433
    %v1435 = vsel %vm796, %v1431, 0.0
    %1436 = vadd.xlane.f32.xlu0 %v1435
    %v1437 = vpop.xlane.xlu0 %1436
    %v1438 = vmax.f32 %v1434, 1e-30
    %v1439 = vmax.f32 %v1437, 1e-30
    %v1440 = vrcp.pop %v1438
    %v1441 = vrcp.pop %v1439
    %v1442 = vmul.f32 %v1430, %v1440
    %v1443 = vmul.f32 %v1431, %v1441
    %v1444 = vpack.c.bf16 %v1443, %v1442
    %v1445 = vperm.slane %v106, 2
    %v1447 = vsel %vm796, %v1444, 0
    %1449 = vmatpush.bf16.msra.mxu0 0
    %1450 = vmatpush.bf16.msra.mxu0 0
    %1451 = vmatpush.bf16.msra.mxu0 0
    %1452 = vmatpush.bf16.msra.mxu0 0
    %1453 = vmatpush.bf16.msra.mxu0 0
    %1454 = vmatpush.bf16.msra.mxu0 0
    %1455 = vmatpush.bf16.msra.mxu0 0
    %1456 = vmatpush.bf16.msra.mxu0 %v1032
    %1457 = vmatmul.bf16.gmra.mxu0 %v1447
    %v1458 = vpop.f32.mrf.mxu0
    %v1459 = vadd.f32 %v1445, %v1458
    %v1460 = vpop.f32.mrf.mxu0
    %v1461 = vadd.f32 %v1445, %v1460
    %1462 = vdwg.mxu0
    %v1463 = vpack.c.bf16 %v1461, %v1459
    %1464 = vmatpush.bf16.msra.mxu0 0
    %1465 = vmatpush.bf16.msra.mxu0 0
    %1466 = vmatpush.bf16.msra.mxu0 0
    %1467 = vmatpush.bf16.msra.mxu0 0
    %1468 = vmatpush.bf16.msra.mxu0 0
    %1469 = vmatpush.bf16.msra.mxu0 0
    %1470 = vmatpush.bf16.msra.mxu0 0
    %1471 = vmatpush.bf16.msra.mxu0 %v1463
    %1472 = vmatmul.bf16.gmra.mxu0 %v845
    %v1473 = vpop.f32.mrf.mxu0
    %v1474 = vadd.f32 0.0, %v1473
    %v1475 = vpop.f32.mrf.mxu0
    %v1476 = vadd.f32 0.0, %v1475
    %1477 = vdwg.mxu0
    %v1478 = vperm.slane %v127, 2
    %v1479 = vmul.f32 %v1474, %v1478
    %v1480 = vmul.f32 %v1476, %v1478
    %v1481 = vsub.f32 %v1459, %v1479
    %v1482 = vsub.f32 %v1461, %v1480
    %v1483 = vmul.f32 %v1481, %v1481
    %v1484 = vmul.f32 %v1482, %v1482
    %v1485 = vpack.c.bf16 %v1484, %v1483
    %v1486 = vperm.slane %v127, 0
    %v1487 = vmul.f32 %v1486, %v1481
    %v1488 = vmul.f32 %v1486, %v1482
    %1489 = vmatpush.bf16.msra.mxu0 0
    %1490 = vmatpush.bf16.msra.mxu0 0
    %1491 = vmatpush.bf16.msra.mxu0 0
    %1492 = vmatpush.bf16.msra.mxu0 0
    %1493 = vmatpush.bf16.msra.mxu0 0
    %1494 = vmatpush.bf16.msra.mxu0 0
    %1495 = vmatpush.bf16.msra.mxu0 0
    %1496 = vmatpush.bf16.msra.mxu0 %v1485
    %1497 = vmatmul.bf16.gmra.mxu0 %v845
    %v1498 = vpop.f32.mrf.mxu0
    %v1499 = vadd.f32 1e-05, %v1498
    %v1500 = vpop.f32.mrf.mxu0
    %v1501 = vadd.f32 1e-05, %v1500
    %1502 = vdwg.mxu0
    %v1503 = vrsqrt.pop %v1499
    %v1504 = vmul.f32 %v1503, %v1499
    %v1505 = vmul.f32 %v1504, %v1503
    %v1506 = vmul.f32 0.5, %v1505
    %v1507 = vsub.f32 1.5, %v1506
    %v1508 = vmul.f32 %v1503, %v1507
    %vm1509 = vweird.f32 %v1499
    %vm1510 = vweird.f32 %v1503
    %vm1511 = vmor %vm1509, %vm1510
    %v1512 = vsel %vm1511, %v1503, %v1508
    %v1513 = vrsqrt.pop %v1501
    %v1514 = vmul.f32 %v1513, %v1501
    %v1515 = vmul.f32 %v1514, %v1513
    %v1516 = vmul.f32 0.5, %v1515
    %v1517 = vsub.f32 1.5, %v1516
    %v1518 = vmul.f32 %v1513, %v1517
    %vm1519 = vweird.f32 %v1501
    %vm1520 = vweird.f32 %v1513
    %vm1521 = vmor %vm1519, %vm1520
    %v1522 = vsel %vm1521, %v1513, %v1518
    %v1523 = vmul.f32 %v1487, %v1512
    %v1524 = vmul.f32 %v1488, %v1522
    %v1525 = vperm.slane %v127, 1
    %v1526 = vadd.f32 %v1523, %v1525
    %v1527 = vadd.f32 %v1524, %v1525
    %vm1528 = vcmp.gt.f32.partialorder %v1526, 0.0
    %vm1529 = vcmp.gt.f32.partialorder %v1527, 0.0
    %v1530 = vmul.f32 %v1526, 0.01
    %v1531 = vmul.f32 %v1527, 0.01
    %v1532 = vsel %vm1528, %v1526, %v1530
    %v1533 = vsel %vm1529, %v1527, %v1531
    %v1534 = vpack.c.bf16 %v1533, %v1532
    %v1551 = vunpack.c.l.b16 %v108
    %v1552 = vunpack.c.h.b16 %v108
    %v1553 = vunpack.c.l.b16 %v109
    %v1554 = vunpack.c.h.b16 %v109
    %v1555 = vunpack.c.l.b16 %v110
    %v1556 = vunpack.c.h.b16 %v110
    %v1557 = vunpack.c.l.b16 %v111
    %v1558 = vunpack.c.h.b16 %v111
    %v1559 = vunpack.c.l.b16 %v112
    %v1560 = vunpack.c.h.b16 %v112
    %v1561 = vunpack.c.l.b16 %v113
    %v1562 = vunpack.c.h.b16 %v113
    %v1563 = vunpack.c.l.b16 %v114
    %v1564 = vunpack.c.h.b16 %v114
    %v1565 = vunpack.c.l.b16 %v115
    %v1566 = vunpack.c.h.b16 %v115
    %v1567 = vunpack.c.l.b16 %v116
    %v1568 = vunpack.c.h.b16 %v116
    %v1569 = vunpack.c.l.b16 %v117
    %v1570 = vunpack.c.h.b16 %v117
    %v1571 = vunpack.c.l.b16 %v118
    %v1572 = vunpack.c.h.b16 %v118
    %v1573 = vunpack.c.l.b16 %v119
    %v1574 = vunpack.c.h.b16 %v119
    %v1575 = vunpack.c.l.b16 %v120
    %v1576 = vunpack.c.h.b16 %v120
    %v1577 = vunpack.c.l.b16 %v121
    %v1578 = vunpack.c.h.b16 %v121
    %v1579 = vunpack.c.l.b16 %v122
    %v1580 = vunpack.c.h.b16 %v122
    %v1581 = vunpack.c.l.b16 %v123
    %v1582 = vunpack.c.h.b16 %v123
    %v1583 = vpack.c.b16 %v1553, %v1551
    %v1584 = vpack.c.b16 %v1554, %v1552
    %v1585 = vpack.c.b16 %v1557, %v1555
    %v1586 = vpack.c.b16 %v1558, %v1556
    %v1587 = vpack.c.b16 %v1561, %v1559
    %v1588 = vpack.c.b16 %v1562, %v1560
    %v1589 = vpack.c.b16 %v1565, %v1563
    %v1590 = vpack.c.b16 %v1566, %v1564
    %v1591 = vpack.c.b16 %v1569, %v1567
    %v1592 = vpack.c.b16 %v1570, %v1568
    %v1593 = vpack.c.b16 %v1573, %v1571
    %v1594 = vpack.c.b16 %v1574, %v1572
    %v1595 = vpack.c.b16 %v1577, %v1575
    %v1596 = vpack.c.b16 %v1578, %v1576
    %v1597 = vpack.c.b16 %v1581, %v1579
    %v1598 = vpack.c.b16 %v1582, %v1580
    %1615 = vmatpush.bf16.msra.mxu0 %v1597
    %1616 = vmatpush.bf16.msra.mxu0 %v1595
    %1617 = vmatpush.bf16.msra.mxu0 %v1593
    %1618 = vmatpush.bf16.msra.mxu0 %v1591
    %1619 = vmatpush.bf16.msra.mxu0 %v1589
    %1620 = vmatpush.bf16.msra.mxu0 %v1587
    %1621 = vmatpush.bf16.msra.mxu0 %v1585
    %1622 = vmatpush.bf16.msra.mxu0 %v1583
    %1623 = vmatmul.bf16.gmra.mxu0 %v1534
    %v1624 = vpop.f32.mrf.mxu0
    %v1625 = vadd.f32 0.0, %v1624
    %v1626 = vpop.f32.mrf.mxu0
    %v1627 = vadd.f32 0.0, %v1626
    %1628 = vdwg.mxu0
    %1629 = vmatpush.bf16.msra.mxu0 %v1598
    %1630 = vmatpush.bf16.msra.mxu0 %v1596
    %1631 = vmatpush.bf16.msra.mxu0 %v1594
    %1632 = vmatpush.bf16.msra.mxu0 %v1592
    %1633 = vmatpush.bf16.msra.mxu0 %v1590
    %1634 = vmatpush.bf16.msra.mxu0 %v1588
    %1635 = vmatpush.bf16.msra.mxu0 %v1586
    %1636 = vmatpush.bf16.msra.mxu0 %v1584
    %1637 = vmatmul.bf16.gmra.mxu0 %v1534
    %v1638 = vpop.f32.mrf.mxu0
    %v1639 = vadd.f32 0.0, %v1638
    %v1640 = vpop.f32.mrf.mxu0
    %v1641 = vadd.f32 0.0, %v1640
    %1642 = vdwg.mxu0
    %v1643 = vperm.slane %v124, 0
    %v1644 = vadd.f32 %v1625, %v1643
    %v1645 = vadd.f32 %v1627, %v1643
    %v1646 = vperm.slane %v124, 1
    %v1647 = vadd.f32 %v1639, %v1646
    %v1648 = vadd.f32 %v1641, %v1646
    %v1649 = vpack.c.bf16 %v1645, %v1644
    %v1650 = vpack.c.bf16 %v1648, %v1647
    %v1651 = vpack.c.bf16 %v125, %v125
    %v1653 = vsel %vm399, %v1651, 0
    %1655 = vmatpush.bf16.msra.mxu0 0
    %1656 = vmatpush.bf16.msra.mxu0 0
    %1657 = vmatpush.bf16.msra.mxu0 0
    %1658 = vmatpush.bf16.msra.mxu0 0
    %1659 = vmatpush.bf16.msra.mxu0 0
    %1660 = vmatpush.bf16.msra.mxu0 %v1653
    %1661 = vmatpush.bf16.msra.mxu0 %v1650
    %1662 = vmatpush.bf16.msra.mxu0 %v1649
    %1663 = vmatmul.bf16.gmra.mxu0 %v352
    %v1664 = vpop.f32.mrf.mxu0
    %v1665 = vadd.f32 0.0, %v1664
    %v1666 = vpop.f32.mrf.mxu0
    %v1667 = vadd.f32 0.0, %v1666
    %1668 = vmatmul.bf16.gmra.mxu0 %v355
    %v1669 = vpop.f32.mrf.mxu0
    %v1670 = vadd.f32 0.0, %v1669
    %v1671 = vpop.f32.mrf.mxu0
    %v1672 = vadd.f32 0.0, %v1671
    %1673 = vmatmul.bf16.gmra.mxu0 %v358
    %v1674 = vpop.f32.mrf.mxu0
    %v1675 = vadd.f32 0.0, %v1674
    %v1676 = vpop.f32.mrf.mxu0
    %v1677 = vadd.f32 0.0, %v1676
    %1678 = vmatmul.bf16.gmra.mxu0 %v361
    %v1679 = vpop.f32.mrf.mxu0
    %v1680 = vadd.f32 0.0, %v1679
    %v1681 = vpop.f32.mrf.mxu0
    %v1682 = vadd.f32 0.0, %v1681
    %1683 = vmatmul.bf16.gmra.mxu0 %v364
    %v1684 = vpop.f32.mrf.mxu0
    %v1685 = vadd.f32 0.0, %v1684
    %v1686 = vpop.f32.mrf.mxu0
    %v1687 = vadd.f32 0.0, %v1686
    %1688 = vmatmul.bf16.gmra.mxu0 %v367
    %v1689 = vpop.f32.mrf.mxu0
    %v1690 = vadd.f32 0.0, %v1689
    %v1691 = vpop.f32.mrf.mxu0
    %v1692 = vadd.f32 0.0, %v1691
    %1693 = vmatmul.bf16.gmra.mxu0 %v370
    %v1694 = vpop.f32.mrf.mxu0
    %v1695 = vadd.f32 0.0, %v1694
    %v1696 = vpop.f32.mrf.mxu0
    %v1697 = vadd.f32 0.0, %v1696
    %1698 = vmatmul.bf16.gmra.mxu0 %v373
    %v1699 = vpop.f32.mrf.mxu0
    %v1700 = vadd.f32 0.0, %v1699
    %v1701 = vpop.f32.mrf.mxu0
    %v1702 = vadd.f32 0.0, %v1701
    %1703 = vmatmul.bf16.gmra.mxu0 %v376
    %v1704 = vpop.f32.mrf.mxu0
    %v1705 = vadd.f32 0.0, %v1704
    %v1706 = vpop.f32.mrf.mxu0
    %v1707 = vadd.f32 0.0, %v1706
    %1708 = vmatmul.bf16.gmra.mxu0 %v379
    %v1709 = vpop.f32.mrf.mxu0
    %v1710 = vadd.f32 0.0, %v1709
    %v1711 = vpop.f32.mrf.mxu0
    %v1712 = vadd.f32 0.0, %v1711
    %1713 = vmatmul.bf16.gmra.mxu0 %v382
    %v1714 = vpop.f32.mrf.mxu0
    %v1715 = vadd.f32 0.0, %v1714
    %v1716 = vpop.f32.mrf.mxu0
    %v1717 = vadd.f32 0.0, %v1716
    %1718 = vmatmul.bf16.gmra.mxu0 %v385
    %v1719 = vpop.f32.mrf.mxu0
    %v1720 = vadd.f32 0.0, %v1719
    %v1721 = vpop.f32.mrf.mxu0
    %v1722 = vadd.f32 0.0, %v1721
    %1723 = vmatmul.bf16.gmra.mxu0 %v388
    %v1724 = vpop.f32.mrf.mxu0
    %v1725 = vadd.f32 0.0, %v1724
    %v1726 = vpop.f32.mrf.mxu0
    %v1727 = vadd.f32 0.0, %v1726
    %1728 = vmatmul.bf16.gmra.mxu0 %v391
    %v1729 = vpop.f32.mrf.mxu0
    %v1730 = vadd.f32 0.0, %v1729
    %v1731 = vpop.f32.mrf.mxu0
    %v1732 = vadd.f32 0.0, %v1731
    %1733 = vmatmul.bf16.gmra.mxu0 %v394
    %v1734 = vpop.f32.mrf.mxu0
    %v1735 = vadd.f32 0.0, %v1734
    %v1736 = vpop.f32.mrf.mxu0
    %v1737 = vadd.f32 0.0, %v1736
    %1738 = vmatmul.bf16.gmra.mxu0 %v397
    %v1739 = vpop.f32.mrf.mxu0
    %v1740 = vadd.f32 0.0, %v1739
    %v1741 = vpop.f32.mrf.mxu0
    %v1742 = vadd.f32 0.0, %v1741
    %1743 = vdwg.mxu0
    %vm1744 = vcmp.gt.f32.partialorder %v1665, 0.0
    %vm1745 = vcmp.gt.f32.partialorder %v1667, 0.0
    %vm1746 = vcmp.gt.f32.partialorder %v1670, 0.0
    %vm1747 = vcmp.gt.f32.partialorder %v1672, 0.0
    %vm1748 = vcmp.gt.f32.partialorder %v1675, 0.0
    %vm1749 = vcmp.gt.f32.partialorder %v1677, 0.0
    %vm1750 = vcmp.gt.f32.partialorder %v1680, 0.0
    %vm1751 = vcmp.gt.f32.partialorder %v1682, 0.0
    %vm1752 = vcmp.gt.f32.partialorder %v1685, 0.0
    %vm1753 = vcmp.gt.f32.partialorder %v1687, 0.0
    %vm1754 = vcmp.gt.f32.partialorder %v1690, 0.0
    %vm1755 = vcmp.gt.f32.partialorder %v1692, 0.0
    %vm1756 = vcmp.gt.f32.partialorder %v1695, 0.0
    %vm1757 = vcmp.gt.f32.partialorder %v1697, 0.0
    %vm1758 = vcmp.gt.f32.partialorder %v1700, 0.0
    %vm1759 = vcmp.gt.f32.partialorder %v1702, 0.0
    %vm1760 = vcmp.gt.f32.partialorder %v1705, 0.0
    %vm1761 = vcmp.gt.f32.partialorder %v1707, 0.0
    %vm1762 = vcmp.gt.f32.partialorder %v1710, 0.0
    %vm1763 = vcmp.gt.f32.partialorder %v1712, 0.0
    %vm1764 = vcmp.gt.f32.partialorder %v1715, 0.0
    %vm1765 = vcmp.gt.f32.partialorder %v1717, 0.0
    %vm1766 = vcmp.gt.f32.partialorder %v1720, 0.0
    %vm1767 = vcmp.gt.f32.partialorder %v1722, 0.0
    %vm1768 = vcmp.gt.f32.partialorder %v1725, 0.0
    %vm1769 = vcmp.gt.f32.partialorder %v1727, 0.0
    %vm1770 = vcmp.gt.f32.partialorder %v1730, 0.0
    %vm1771 = vcmp.gt.f32.partialorder %v1732, 0.0
    %vm1772 = vcmp.gt.f32.partialorder %v1735, 0.0
    %vm1773 = vcmp.gt.f32.partialorder %v1737, 0.0
    %vm1774 = vcmp.gt.f32.partialorder %v1740, 0.0
    %vm1775 = vcmp.gt.f32.partialorder %v1742, 0.0
    %v1776 = vmul.f32 %v1665, 0.2
    %v1777 = vmul.f32 %v1667, 0.2
    %v1778 = vmul.f32 %v1670, 0.2
    %v1779 = vmul.f32 %v1672, 0.2
    %v1780 = vmul.f32 %v1675, 0.2
    %v1781 = vmul.f32 %v1677, 0.2
    %v1782 = vmul.f32 %v1680, 0.2
    %v1783 = vmul.f32 %v1682, 0.2
    %v1784 = vmul.f32 %v1685, 0.2
    %v1785 = vmul.f32 %v1687, 0.2
    %v1786 = vmul.f32 %v1690, 0.2
    %v1787 = vmul.f32 %v1692, 0.2
    %v1788 = vmul.f32 %v1695, 0.2
    %v1789 = vmul.f32 %v1697, 0.2
    %v1790 = vmul.f32 %v1700, 0.2
    %v1791 = vmul.f32 %v1702, 0.2
    %v1792 = vmul.f32 %v1705, 0.2
    %v1793 = vmul.f32 %v1707, 0.2
    %v1794 = vmul.f32 %v1710, 0.2
    %v1795 = vmul.f32 %v1712, 0.2
    %v1796 = vmul.f32 %v1715, 0.2
    %v1797 = vmul.f32 %v1717, 0.2
    %v1798 = vmul.f32 %v1720, 0.2
    %v1799 = vmul.f32 %v1722, 0.2
    %v1800 = vmul.f32 %v1725, 0.2
    %v1801 = vmul.f32 %v1727, 0.2
    %v1802 = vmul.f32 %v1730, 0.2
    %v1803 = vmul.f32 %v1732, 0.2
    %v1804 = vmul.f32 %v1735, 0.2
    %v1805 = vmul.f32 %v1737, 0.2
    %v1806 = vmul.f32 %v1740, 0.2
    %v1807 = vmul.f32 %v1742, 0.2
    %v1808 = vsel %vm1744, %v1665, %v1776
    %v1809 = vsel %vm1745, %v1667, %v1777
    %v1810 = vsel %vm1746, %v1670, %v1778
    %v1811 = vsel %vm1747, %v1672, %v1779
    %v1812 = vsel %vm1748, %v1675, %v1780
    %v1813 = vsel %vm1749, %v1677, %v1781
    %v1814 = vsel %vm1750, %v1680, %v1782
    %v1815 = vsel %vm1751, %v1682, %v1783
    %v1816 = vsel %vm1752, %v1685, %v1784
    %v1817 = vsel %vm1753, %v1687, %v1785
    %v1818 = vsel %vm1754, %v1690, %v1786
    %v1819 = vsel %vm1755, %v1692, %v1787
    %v1820 = vsel %vm1756, %v1695, %v1788
    %v1821 = vsel %vm1757, %v1697, %v1789
    %v1822 = vsel %vm1758, %v1700, %v1790
    %v1823 = vsel %vm1759, %v1702, %v1791
    %v1824 = vsel %vm1760, %v1705, %v1792
    %v1825 = vsel %vm1761, %v1707, %v1793
    %v1826 = vsel %vm1762, %v1710, %v1794
    %v1827 = vsel %vm1763, %v1712, %v1795
    %v1828 = vsel %vm1764, %v1715, %v1796
    %v1829 = vsel %vm1765, %v1717, %v1797
    %v1830 = vsel %vm1766, %v1720, %v1798
    %v1831 = vsel %vm1767, %v1722, %v1799
    %v1832 = vsel %vm1768, %v1725, %v1800
    %v1833 = vsel %vm1769, %v1727, %v1801
    %v1834 = vsel %vm1770, %v1730, %v1802
    %v1835 = vsel %vm1771, %v1732, %v1803
    %v1836 = vsel %vm1772, %v1735, %v1804
    %v1837 = vsel %vm1773, %v1737, %v1805
    %v1838 = vsel %vm1774, %v1740, %v1806
    %v1839 = vsel %vm1775, %v1742, %v1807
    %v1840 = vperm.slane %v124, 3
    %v1841 = vmul.f32 %v1808, %v1840
    %v1842 = vmul.f32 %v1809, %v1840
    %v1843 = vmul.f32 %v1810, %v1840
    %v1844 = vmul.f32 %v1811, %v1840
    %v1845 = vmul.f32 %v1812, %v1840
    %v1846 = vmul.f32 %v1813, %v1840
    %v1847 = vmul.f32 %v1814, %v1840
    %v1848 = vmul.f32 %v1815, %v1840
    %v1849 = vmul.f32 %v1816, %v1840
    %v1850 = vmul.f32 %v1817, %v1840
    %v1851 = vmul.f32 %v1818, %v1840
    %v1852 = vmul.f32 %v1819, %v1840
    %v1853 = vmul.f32 %v1820, %v1840
    %v1854 = vmul.f32 %v1821, %v1840
    %v1855 = vmul.f32 %v1822, %v1840
    %v1856 = vmul.f32 %v1823, %v1840
    %v1857 = vmul.f32 %v1824, %v1840
    %v1858 = vmul.f32 %v1825, %v1840
    %v1859 = vmul.f32 %v1826, %v1840
    %v1860 = vmul.f32 %v1827, %v1840
    %v1861 = vmul.f32 %v1828, %v1840
    %v1862 = vmul.f32 %v1829, %v1840
    %v1863 = vmul.f32 %v1830, %v1840
    %v1864 = vmul.f32 %v1831, %v1840
    %v1865 = vmul.f32 %v1832, %v1840
    %v1866 = vmul.f32 %v1833, %v1840
    %v1867 = vmul.f32 %v1834, %v1840
    %v1868 = vmul.f32 %v1835, %v1840
    %v1869 = vmul.f32 %v1836, %v1840
    %v1870 = vmul.f32 %v1837, %v1840
    %v1871 = vmul.f32 %v1838, %v1840
    %v1872 = vmul.f32 %v1839, %v1840
    %1873 = vadd.xlane.f32.xlu0 %v1841
    %v1874 = vpop.xlane.xlu0 %1873
    %1875 = vadd.xlane.f32.xlu0 %v1842
    %v1876 = vpop.xlane.xlu0 %1875
    %1877 = vadd.xlane.f32.xlu0 %v1843
    %v1878 = vpop.xlane.xlu0 %1877
    %1879 = vadd.xlane.f32.xlu0 %v1844
    %v1880 = vpop.xlane.xlu0 %1879
    %1881 = vadd.xlane.f32.xlu0 %v1845
    %v1882 = vpop.xlane.xlu0 %1881
    %1883 = vadd.xlane.f32.xlu0 %v1846
    %v1884 = vpop.xlane.xlu0 %1883
    %1885 = vadd.xlane.f32.xlu0 %v1847
    %v1886 = vpop.xlane.xlu0 %1885
    %1887 = vadd.xlane.f32.xlu0 %v1848
    %v1888 = vpop.xlane.xlu0 %1887
    %1889 = vadd.xlane.f32.xlu0 %v1849
    %v1890 = vpop.xlane.xlu0 %1889
    %1891 = vadd.xlane.f32.xlu0 %v1850
    %v1892 = vpop.xlane.xlu0 %1891
    %1893 = vadd.xlane.f32.xlu0 %v1851
    %v1894 = vpop.xlane.xlu0 %1893
    %1895 = vadd.xlane.f32.xlu0 %v1852
    %v1896 = vpop.xlane.xlu0 %1895
    %1897 = vadd.xlane.f32.xlu0 %v1853
    %v1898 = vpop.xlane.xlu0 %1897
    %1899 = vadd.xlane.f32.xlu0 %v1854
    %v1900 = vpop.xlane.xlu0 %1899
    %1901 = vadd.xlane.f32.xlu0 %v1855
    %v1902 = vpop.xlane.xlu0 %1901
    %1903 = vadd.xlane.f32.xlu0 %v1856
    %v1904 = vpop.xlane.xlu0 %1903
    %1905 = vadd.xlane.f32.xlu0 %v1857
    %v1906 = vpop.xlane.xlu0 %1905
    %1907 = vadd.xlane.f32.xlu0 %v1858
    %v1908 = vpop.xlane.xlu0 %1907
    %1909 = vadd.xlane.f32.xlu0 %v1859
    %v1910 = vpop.xlane.xlu0 %1909
    %1911 = vadd.xlane.f32.xlu0 %v1860
    %v1912 = vpop.xlane.xlu0 %1911
    %1913 = vadd.xlane.f32.xlu0 %v1861
    %v1914 = vpop.xlane.xlu0 %1913
    %1915 = vadd.xlane.f32.xlu0 %v1862
    %v1916 = vpop.xlane.xlu0 %1915
    %1917 = vadd.xlane.f32.xlu0 %v1863
    %v1918 = vpop.xlane.xlu0 %1917
    %1919 = vadd.xlane.f32.xlu0 %v1864
    %v1920 = vpop.xlane.xlu0 %1919
    %1921 = vadd.xlane.f32.xlu0 %v1865
    %v1922 = vpop.xlane.xlu0 %1921
    %1923 = vadd.xlane.f32.xlu0 %v1866
    %v1924 = vpop.xlane.xlu0 %1923
    %1925 = vadd.xlane.f32.xlu0 %v1867
    %v1926 = vpop.xlane.xlu0 %1925
    %1927 = vadd.xlane.f32.xlu0 %v1868
    %v1928 = vpop.xlane.xlu0 %1927
    %1929 = vadd.xlane.f32.xlu0 %v1869
    %v1930 = vpop.xlane.xlu0 %1929
    %1931 = vadd.xlane.f32.xlu0 %v1870
    %v1932 = vpop.xlane.xlu0 %1931
    %1933 = vadd.xlane.f32.xlu0 %v1871
    %v1934 = vpop.xlane.xlu0 %1933
    %1935 = vadd.xlane.f32.xlu0 %v1872
    %v1936 = vpop.xlane.xlu0 %1935
    %v1969 = vperm.slane %v1874, %v720
    %v1970 = vperm.slane %v1876, %v722
    %v1971 = vsel %vm724, %v1970, %v1969
    %v1972 = vperm.slane %v1878, %v720
    %v1973 = vperm.slane %v1880, %v722
    %v1974 = vsel %vm724, %v1973, %v1972
    %v1975 = vperm.slane %v1882, %v720
    %v1976 = vperm.slane %v1884, %v722
    %v1977 = vsel %vm724, %v1976, %v1975
    %v1978 = vperm.slane %v1886, %v720
    %v1979 = vperm.slane %v1888, %v722
    %v1980 = vsel %vm724, %v1979, %v1978
    %v1981 = vperm.slane %v1890, %v720
    %v1982 = vperm.slane %v1892, %v722
    %v1983 = vsel %vm724, %v1982, %v1981
    %v1984 = vperm.slane %v1894, %v720
    %v1985 = vperm.slane %v1896, %v722
    %v1986 = vsel %vm724, %v1985, %v1984
    %v1987 = vperm.slane %v1898, %v720
    %v1988 = vperm.slane %v1900, %v722
    %v1989 = vsel %vm724, %v1988, %v1987
    %v1990 = vperm.slane %v1902, %v720
    %v1991 = vperm.slane %v1904, %v722
    %v1992 = vsel %vm724, %v1991, %v1990
    %v1993 = vperm.slane %v1906, %v720
    %v1994 = vperm.slane %v1908, %v722
    %v1995 = vsel %vm724, %v1994, %v1993
    %v1996 = vperm.slane %v1910, %v720
    %v1997 = vperm.slane %v1912, %v722
    %v1998 = vsel %vm724, %v1997, %v1996
    %v1999 = vperm.slane %v1914, %v720
    %v2000 = vperm.slane %v1916, %v722
    %v2001 = vsel %vm724, %v2000, %v1999
    %v2002 = vperm.slane %v1918, %v720
    %v2003 = vperm.slane %v1920, %v722
    %v2004 = vsel %vm724, %v2003, %v2002
    %v2005 = vperm.slane %v1922, %v720
    %v2006 = vperm.slane %v1924, %v722
    %v2007 = vsel %vm724, %v2006, %v2005
    %v2008 = vperm.slane %v1926, %v720
    %v2009 = vperm.slane %v1928, %v722
    %v2010 = vsel %vm724, %v2009, %v2008
    %v2011 = vperm.slane %v1930, %v720
    %v2012 = vperm.slane %v1932, %v722
    %v2013 = vsel %vm724, %v2012, %v2011
    %v2014 = vperm.slane %v1934, %v720
    %v2015 = vperm.slane %v1936, %v722
    %v2016 = vsel %vm724, %v2015, %v2014
    %v2017 = vsel %vm771, %v1974, %v1971
    %v2018 = vsel %vm773, %v1977, %v2017
    %v2019 = vsel %vm775, %v1980, %v2018
    %v2020 = vsel %vm777, %v1983, %v2019
    %v2021 = vsel %vm779, %v1986, %v2020
    %v2022 = vsel %vm781, %v1989, %v2021
    %v2023 = vsel %vm783, %v1992, %v2022
    %v2024 = vsel %vm771, %v1998, %v1995
    %v2025 = vsel %vm773, %v2001, %v2024
    %v2026 = vsel %vm775, %v2004, %v2025
    %v2027 = vsel %vm777, %v2007, %v2026
    %v2028 = vsel %vm779, %v2010, %v2027
    %v2029 = vsel %vm781, %v2013, %v2028
    %v2030 = vsel %vm783, %v2016, %v2029
    %v2033 = vsel %vm685, %v2023, -1e+30
    %v2034 = vsel %vm686, %v2030, -1e+30
    %v2035 = vsel %vm796, %v2033, -inf
    %2036 = vmax.xlane.f32.xlu0 %v2035
    %v2037 = vpop.xlane.xlu0 %2036
    %v2038 = vsel %vm796, %v2034, -inf
    %2039 = vmax.xlane.f32.xlu0 %v2038
    %v2040 = vpop.xlane.xlu0 %2039
    %v2041 = vsub.f32 %v2033, %v2037
    %v2042 = vsub.f32 %v2034, %v2040
    %v2043 = vmul.f32 %v2041, 1.442695
    %v2044 = vpow.pop %v2043
    %v2045 = vmul.f32 %v2042, 1.442695
    %v2046 = vpow.pop %v2045
    %v2047 = vmul.f32 %v2044, %v67
    %v2048 = vmul.f32 %v2046, %v68
    %v2049 = vsel %vm796, %v2047, 0.0
    %2050 = vadd.xlane.f32.xlu0 %v2049
    %v2051 = vpop.xlane.xlu0 %2050
    %v2052 = vsel %vm796, %v2048, 0.0
    %2053 = vadd.xlane.f32.xlu0 %v2052
    %v2054 = vpop.xlane.xlu0 %2053
    %v2055 = vmax.f32 %v2051, 1e-30
    %v2056 = vmax.f32 %v2054, 1e-30
    %v2057 = vrcp.pop %v2055
    %v2058 = vrcp.pop %v2056
    %v2059 = vmul.f32 %v2047, %v2057
    %v2060 = vmul.f32 %v2048, %v2058
    %v2061 = vpack.c.bf16 %v2060, %v2059
    %v2062 = vperm.slane %v124, 2
    %v2064 = vsel %vm796, %v2061, 0
    %2066 = vmatpush.bf16.msra.mxu0 0
    %2067 = vmatpush.bf16.msra.mxu0 0
    %2068 = vmatpush.bf16.msra.mxu0 0
    %2069 = vmatpush.bf16.msra.mxu0 0
    %2070 = vmatpush.bf16.msra.mxu0 0
    %2071 = vmatpush.bf16.msra.mxu0 0
    %2072 = vmatpush.bf16.msra.mxu0 0
    %2073 = vmatpush.bf16.msra.mxu0 %v1649
    %2074 = vmatmul.bf16.gmra.mxu0 %v2064
    %v2075 = vpop.f32.mrf.mxu0
    %v2076 = vadd.f32 %v2062, %v2075
    %v2077 = vpop.f32.mrf.mxu0
    %v2078 = vadd.f32 %v2062, %v2077
    %2079 = vdwg.mxu0
    %v2080 = vpack.c.bf16 %v69, %v69
    %v2081 = vpack.c.bf16 %v2078, %v2076
    %v2083 = vsel %vm796, %v2080, 0
    %2085 = vmatpush.bf16.msra.mxu0 0
    %2086 = vmatpush.bf16.msra.mxu0 0
    %2087 = vmatpush.bf16.msra.mxu0 0
    %2088 = vmatpush.bf16.msra.mxu0 0
    %2089 = vmatpush.bf16.msra.mxu0 0
    %2090 = vmatpush.bf16.msra.mxu0 0
    %2091 = vmatpush.bf16.msra.mxu0 0
    %2092 = vmatpush.bf16.msra.mxu0 %v2081
    %2093 = vmatmul.bf16.gmra.mxu0 %v2083
    %v2094 = vpop.f32.mrf.mxu0
    %v2095 = vadd.f32 0.0, %v2094
    %v2096 = vpop.f32.mrf.mxu0
    %2097 = vdwg.mxu0
    %v2098 = vpack.c.bf16 %v2095, %v2095
    %v2099 = vperm.slane %v144, 0
    %v2116 = vunpack.c.l.b16 %v128
    %v2117 = vunpack.c.l.b16 %v129
    %v2118 = vunpack.c.l.b16 %v130
    %v2119 = vunpack.c.l.b16 %v131
    %v2120 = vunpack.c.l.b16 %v132
    %v2121 = vunpack.c.l.b16 %v133
    %v2122 = vunpack.c.l.b16 %v134
    %v2123 = vunpack.c.l.b16 %v135
    %v2124 = vunpack.c.l.b16 %v136
    %v2125 = vunpack.c.l.b16 %v137
    %v2126 = vunpack.c.l.b16 %v138
    %v2127 = vunpack.c.l.b16 %v139
    %v2128 = vunpack.c.l.b16 %v140
    %v2129 = vunpack.c.l.b16 %v141
    %v2130 = vunpack.c.l.b16 %v142
    %v2131 = vunpack.c.l.b16 %v143
    %v2132 = vpack.c.b16 %v2117, %v2116
    %v2133 = vpack.c.b16 %v2119, %v2118
    %v2134 = vpack.c.b16 %v2121, %v2120
    %v2135 = vpack.c.b16 %v2123, %v2122
    %v2136 = vpack.c.b16 %v2125, %v2124
    %v2137 = vpack.c.b16 %v2127, %v2126
    %v2138 = vpack.c.b16 %v2129, %v2128
    %v2139 = vpack.c.b16 %v2131, %v2130
    %2148 = vmatpush.bf16.msra.mxu0 %v2139
    %2149 = vmatpush.bf16.msra.mxu0 %v2138
    %2150 = vmatpush.bf16.msra.mxu0 %v2137
    %2151 = vmatpush.bf16.msra.mxu0 %v2136
    %2152 = vmatpush.bf16.msra.mxu0 %v2135
    %2153 = vmatpush.bf16.msra.mxu0 %v2134
    %2154 = vmatpush.bf16.msra.mxu0 %v2133
    %2155 = vmatpush.bf16.msra.mxu0 %v2132
    %2156 = vmatmul.bf16.gmra.mxu0 %v2098
    %v2157 = vpop.f32.mrf.mxu0
    %v2158 = vadd.f32 %v2099, %v2157
    %v2159 = vpop.f32.mrf.mxu0
    %2160 = vdwg.mxu0
    %vm2161 = vcmp.gt.f32.partialorder %v2158, 0.0
    %v2162 = vmul.f32 %v2158, 0.01
    %v2163 = vsel %vm2161, %v2158, %v2162
    %v2164 = vpack.c.bf16 %v2163, %v2163
    %v2165 = vperm.slane %v144, 1
    %v2166 = vunpack.c.h.b16 %v128
    %v2167 = vunpack.c.h.b16 %v129
    %v2168 = vunpack.c.h.b16 %v130
    %v2169 = vunpack.c.h.b16 %v131
    %v2170 = vunpack.c.h.b16 %v132
    %v2171 = vunpack.c.h.b16 %v133
    %v2172 = vunpack.c.h.b16 %v134
    %v2173 = vunpack.c.h.b16 %v135
    %v2174 = vunpack.c.h.b16 %v136
    %v2175 = vunpack.c.h.b16 %v137
    %v2176 = vunpack.c.h.b16 %v138
    %v2177 = vunpack.c.h.b16 %v139
    %v2178 = vunpack.c.h.b16 %v140
    %v2179 = vunpack.c.h.b16 %v141
    %v2180 = vunpack.c.h.b16 %v142
    %v2181 = vunpack.c.h.b16 %v143
    %v2182 = vpack.c.b16 %v2167, %v2166
    %v2183 = vpack.c.b16 %v2169, %v2168
    %v2184 = vpack.c.b16 %v2171, %v2170
    %v2185 = vpack.c.b16 %v2173, %v2172
    %v2186 = vpack.c.b16 %v2175, %v2174
    %v2187 = vpack.c.b16 %v2177, %v2176
    %v2188 = vpack.c.b16 %v2179, %v2178
    %v2189 = vpack.c.b16 %v2181, %v2180
    %2198 = vmatpush.bf16.msra.mxu0 %v2189
    %2199 = vmatpush.bf16.msra.mxu0 %v2188
    %2200 = vmatpush.bf16.msra.mxu0 %v2187
    %2201 = vmatpush.bf16.msra.mxu0 %v2186
    %2202 = vmatpush.bf16.msra.mxu0 %v2185
    %2203 = vmatpush.bf16.msra.mxu0 %v2184
    %2204 = vmatpush.bf16.msra.mxu0 %v2183
    %2205 = vmatpush.bf16.msra.mxu0 %v2182
    %2206 = vmatmul.bf16.gmra.mxu0 %v2164
    %v2207 = vpop.f32.mrf.mxu0
    %v2208 = vadd.f32 %v2165, %v2207
    %v2209 = vpop.f32.mrf.mxu0
    %2210 = vdwg.mxu0
    %2211 = vst [vmem:[#allocation5] sm:$0xff] %v2208
    // Predicated region
    $region22: #{tpu_custom_call.1} parent=1 // pred_check
      _
    $region23: #{tpu_custom_call.1} parent=1 // pred_check_branch
      %2213 = sbr.rel (0) target = $region25
    $region24: #{tpu_custom_call.1} parent=1 // pred_region
      %2215 = vsyncadd [#allocation4], 0
      %s2217 = sshll.u32 [#allocation5], 4
      %s2218 = int_to_ptr.vmem [resolvable:$true] %s2217
      %s2219 = sshll.u32 %s4, 4
      %s2220 = int_to_ptr.hbm [resolvable:$true] %s2219
      %2222 = dma.vmem_to_hbm [thread:$0]  %s2218, 128, %s2220, [#allocation4]
    $region25: #{tpu_custom_call.1} parent=1 // pred_fallthru
      _
    // Predicated region
    $region26: #{tpu_custom_call.1} parent=1 // pred_check
      _
    $region27: #{tpu_custom_call.1} parent=1 // pred_check_branch
      %2224 = sbr.rel (0) target = $region29
    $region28: #{tpu_custom_call.1} parent=1 // pred_region
      %2226 = dma.done [#allocation4], 128
    $region29: #{tpu_custom_call.1} parent=1 // pred_fallthru
      _
    %2227 = vsyncpa [#allocation3], 1
    %2228 = vsyncpa [#allocation4], 1

</llo_original>
